<compile_context>
chip_gen: v6e
topology: v6e:2x2x1
jax: 0.10.0
libtpu: 0.0.40
codegen_flags: <defaults>
</compile_context>

<pallas_src>
import jax
import jax.numpy as jnp
from jax.experimental import pallas as pl
from jax.experimental.pallas import tpu as pltpu


def se_mul_conv1x1_kernel(gate_ref, w_ref, x_ref, o_ref):
    # gate_ref: (1, Cin)        -- pre-sigmoid SE gate (f32)
    # w_ref:    (Cout, Cin)     -- 1x1 conv weight (native layout, f32)
    # x_ref:    (Cin, HW)       -- activations, NCHW flattened (f32)
    # o_ref:    (Cout, HW)
    g = jax.nn.sigmoid(gate_ref[...])                      # (1, Cin) f32 on EUP
    # Fold the gate into the (small) weight operand in f32, then cast both MXU
    # operands to bf16 — native MXU dtype on all generations; accumulate in f32.
    w_scaled = (w_ref[...] * g).astype(jnp.bfloat16)       # (Cout, Cin)
    x_bf16 = x_ref[...].astype(jnp.bfloat16)               # (Cin, HW)
    o_ref[...] = jnp.dot(
        w_scaled, x_bf16, preferred_element_type=jnp.float32
    ).astype(o_ref.dtype)                                  # MXU: 1x1 conv == matmul


def se_mul_conv1x1(x409, x405, weight):
    """sigmoid(x409) * x405 followed by 1x1 conv (no bias).

    x409:   (N, Cin, 1, 1)
    x405:   (N, Cin, H, W)
    weight: (Cout, Cin, 1, 1)
    returns (N, Cout, H, W)
    """
    N, Cin, H, W = x405.shape
    Cout = weight.shape[0]
    assert N == 1, "module semantics exercised with N=1 (SE block)"
    HW = H * W

    # Native-layout views: pure reshapes, no HBM transpose round-trips.
    x_mat = x405.reshape(Cin, HW)          # (960, 196)
    gate = x409.reshape(1, Cin)            # (1, 960)
    w_mat = weight.reshape(Cout, Cin)      # (160, 960)

    cost = pl.CostEstimate(
        flops=2 * HW * Cin * Cout,
        transcendentals=Cin,
        bytes_accessed=4 * (Cin * HW + Cout * Cin + Cin + Cout * HW),
    )

    # Single grid step: whole problem (~1.5 MiB) fits comfortably in VMEM on
    # every generation; any extra grid steps only add ~0.35us launch overhead.
    # TODO(synk): if H*W or batch ever grows, tile over HW (weight resident),
    # picking HW tiles that are multiples of 512 lanes.
    out_mat = pl.pallas_call(
        se_mul_conv1x1_kernel,
        out_shape=jax.ShapeDtypeStruct((Cout, HW), x405.dtype),
        grid=(1,),
        in_specs=[
            pl.BlockSpec((1, Cin), lambda i: (0, 0)),
            pl.BlockSpec((Cout, Cin), lambda i: (0, 0)),
            pl.BlockSpec((Cin, HW), lambda i: (0, 0)),
        ],
        out_specs=pl.BlockSpec((Cout, HW), lambda i: (0, 0)),
        compiler_params=pltpu.CompilerParams(
            dimension_semantics=("arbitrary",)),
        cost_estimate=cost,
    )(gate, w_mat, x_mat)

    return out_mat.reshape(N, Cout, H, W)  # pure reshape back to NCHW


if __name__ == "__main__":
    key = jax.random.PRNGKey(0)
    k_gate, k_x, k_w = jax.random.split(key, 3)

    N, Cin, H, W, Cout = 1, 960, 14, 14, 160
    x409 = jax.random.normal(k_gate, (N, Cin, 1, 1), dtype=jnp.float32)
    x405 = jax.random.normal(k_x, (N, Cin, H, W), dtype=jnp.float32)
    # Deterministic weight init (Conv2d(960, 160, 1, bias=False) shape).
    weight = (jax.random.normal(k_w, (Cout, Cin, 1, 1), dtype=jnp.float32)
              * (1.0 / jnp.sqrt(Cin)))

    out = jax.block_until_ready(se_mul_conv1x1(x409, x405, weight))

    # Pure-JAX f32 reference; bf16-MXU path needs a relaxed tolerance.
    ref_in = jax.nn.sigmoid(x409) * x405                       # (N,Cin,H,W)
    ref = jnp.einsum("nchw,oc->nohw", ref_in, weight.reshape(Cout, Cin))
    assert out.shape == (N, Cout, H, W)
    assert jnp.allclose(out, ref, atol=2e-2, rtol=2e-2)

    print("KERNEL_OK")
</pallas_src>

<mosaic_0001>
module attributes {stable_mosaic.version = 11 : i64} {
  func.func @se_mul_conv1x1_kernel(%arg0: i32, %arg1: memref<1x960xf32, #tpu.memory_space<vmem>>, %arg2: memref<160x960xf32, #tpu.memory_space<vmem>>, %arg3: memref<960x196xf32, #tpu.memory_space<vmem>>, %arg4: memref<160x196xf32, #tpu.memory_space<vmem>>) attributes {dimension_semantics = [#tpu.dimension_semantics<arbitrary>], iteration_bounds = array<i64: 1>, scalar_prefetch = 0 : i64, scratch_operands = 0 : i64, tpu.core_type = #tpu.core_type<tc>, window_params = [{pipeline_mode = #tpu.pipeline_mode<synchronous>, transform_indices = @transform_0, window_bounds = array<i64: 1, 960>}, {pipeline_mode = #tpu.pipeline_mode<synchronous>, transform_indices = @transform_1, window_bounds = array<i64: 160, 960>}, {pipeline_mode = #tpu.pipeline_mode<synchronous>, transform_indices = @transform_2, window_bounds = array<i64: 960, 196>}, {pipeline_mode = #tpu.pipeline_mode<synchronous>, transform_indices = @transform_3, window_bounds = array<i64: 160, 196>}]} {
    %c0 = arith.constant 0 : index
    %c0_0 = arith.constant 0 : index
    %0 = vector.load %arg1[%c0, %c0_0] : memref<1x960xf32, #tpu.memory_space<vmem>>, vector<1x960xf32>
    %1 = arith.negf %0 : vector<1x960xf32>
    %2 = math.exp %1 : vector<1x960xf32>
    %cst = arith.constant 1.000000e+00 : f32
    %3 = vector.broadcast %cst : f32 to vector<1x960xf32>
    %4 = arith.addf %3, %2 : vector<1x960xf32>
    %5 = arith.divf %3, %4 : vector<1x960xf32>
    %c0_1 = arith.constant 0 : index
    %c0_2 = arith.constant 0 : index
    %6 = vector.load %arg2[%c0_1, %c0_2] : memref<160x960xf32, #tpu.memory_space<vmem>>, vector<160x960xf32>
    %7 = vector.broadcast %5 : vector<1x960xf32> to vector<160x960xf32>
    %8 = arith.mulf %6, %7 : vector<160x960xf32>
    %9 = arith.truncf %8 : vector<160x960xf32> to vector<160x960xbf16>
    %c0_3 = arith.constant 0 : index
    %c0_4 = arith.constant 0 : index
    %10 = vector.load %arg3[%c0_3, %c0_4] : memref<960x196xf32, #tpu.memory_space<vmem>>, vector<960x196xf32>
    %11 = arith.truncf %10 : vector<960x196xf32> to vector<960x196xbf16>
    %cst_5 = arith.constant dense<0.000000e+00> : vector<160x196xf32>
    %12 = tpu.matmul %9, %11, %cst_5 {dimension_numbers = #tpu.dot_dimension_numbers<[1], [0], [0], [1], [0, 0, 1, 1], [], []>} : vector<160x960xbf16>, vector<960x196xbf16>, vector<160x196xf32> -> vector<160x196xf32>
    %c0_6 = arith.constant 0 : index
    %c0_7 = arith.constant 0 : index
    %13 = vector.load %arg4[%c0_6, %c0_7] : memref<160x196xf32, #tpu.memory_space<vmem>>, vector<160x196xf32>
    tpu.vector_store %arg4[%c0_6, %c0_7], %12 {strides = array<i32>} : memref<160x196xf32, #tpu.memory_space<vmem>>, vector<160x196xf32>,
    return
  }
  func.func @transform_0(%arg0: i32) -> (i32, i32) {
    %c0_i32 = arith.constant 0 : i32
    %c0_i32_0 = arith.constant 0 : i32
    %c0_i32_1 = arith.constant 0 : i32
    return %c0_i32, %c0_i32_0 : i32, i32
  }
  func.func @transform_1(%arg0: i32) -> (i32, i32) {
    %c0_i32 = arith.constant 0 : i32
    %c0_i32_0 = arith.constant 0 : i32
    %c0_i32_1 = arith.constant 0 : i32
    return %c0_i32, %c0_i32_0 : i32, i32
  }
  func.func @transform_2(%arg0: i32) -> (i32, i32) {
    %c0_i32 = arith.constant 0 : i32
    %c0_i32_0 = arith.constant 0 : i32
    %c0_i32_1 = arith.constant 0 : i32
    return %c0_i32, %c0_i32_0 : i32, i32
  }
  func.func @transform_3(%arg0: i32) -> (i32, i32) {
    %c0_i32 = arith.constant 0 : i32
    %c0_i32_0 = arith.constant 0 : i32
    %c0_i32_1 = arith.constant 0 : i32
    return %c0_i32, %c0_i32_0 : i32, i32
  }
}

</mosaic_0001>

<llo_original>
// kernel: tpu_custom_call.1
$region0: #{tpu_custom_call.1}
  #allocation0 [shape = 'u32[]', space=smem, size = 0x4, offset = 0x4, fixed_abs, tag = 'smem constant byte address 0x4 - core index']
  #allocation1 [shape = 'u32[144,128]{1,0:T(1,128)}', space=vmem, size = 0x12000, scoped, tag = 'internal scratch']
  %s0 = inlined_call_operand.vmem [shape: f32[1,960], index: 0, kind: input, shape index: {}]
  %s1 = inlined_call_operand.vmem [shape: f32[160,960], index: 1, kind: input, shape index: {}]
  %s2 = inlined_call_operand.vmem [shape: f32[960,196], index: 2, kind: input, shape index: {}]
  %s3 = inlined_call_operand.hbm [shape: f32[160,196], index: 3, kind: output, shape index: {}]
  %s4 = sld [smem:[#allocation0]]
  $region22: #{tpu_custom_call.1} parent=0
    _
  %s6 = ssub.s32 1, %s4
  %s7 = scalar_select 0, %s6, %s4
  $region1: #{tpu_custom_call.1} parent=0
    #allocation2 [shape = 'u8[163840]{0}', space=vmem, size = 0x28000, scoped, tag = 'output window, operand 0, single buffered']
    #allocation3 [shape = 's32[1]{0}', space=sflag, size = 0x4, scoped, tag = 'scoped memory for tpu_custom_call.1']
    %8 = vsyncpa [#allocation3], 0
    // Predicated region
    $region2: #{tpu_custom_call.1} parent=1 // pred_check
      _
    $region3: #{tpu_custom_call.1} parent=1 // pred_check_branch
      %10 = sbr.rel (0) target = $region5
    $region4: #{tpu_custom_call.1} parent=1 // pred_region
      _
    $region5: #{tpu_custom_call.1} parent=1 // pred_fallthru
      _
    // Predicated region
    $region6: #{tpu_custom_call.1} parent=1 // pred_check
      _
    $region7: #{tpu_custom_call.1} parent=1 // pred_check_branch
      %12 = sbr.rel (0) target = $region9
    $region8: #{tpu_custom_call.1} parent=1 // pred_region
      _
    $region9: #{tpu_custom_call.1} parent=1 // pred_fallthru
      _
    // Predicated region
    $region10: #{tpu_custom_call.1} parent=1 // pred_check
      _
    $region11: #{tpu_custom_call.1} parent=1 // pred_check_branch
      %14 = sbr.rel (0) target = $region13
    $region12: #{tpu_custom_call.1} parent=1 // pred_region
      _
    $region13: #{tpu_custom_call.1} parent=1 // pred_fallthru
      _
    %v16 = vld [vmem:[%s0] sm:$0xff]
    %v17 = vxor.u32 %v16, 2147483648
    %v18 = vmul.f32 %v17, 1.442695
    %v19 = vpow.pop %v18
    %v20 = vadd.f32 %v19, 1.0
    %v21 = vrcp.pop %v20
    %v22 = vmul.f32 1.0, %v21
    %v23 = vld [vmem:[%s1] sm:$0xff]
    %v24 = vld [vmem:[%s1 + $0x8] sm:$0xff]
    %v25 = vld [vmem:[%s1 + $0x10] sm:$0xff]
    %v26 = vld [vmem:[%s1 + $0x18] sm:$0xff]
    %v27 = vld [vmem:[%s1 + $0x20] sm:$0xff]
    %v28 = vld [vmem:[%s1 + $0x28] sm:$0xff]
    %v29 = vld [vmem:[%s1 + $0x30] sm:$0xff]
    %v30 = vld [vmem:[%s1 + $0x38] sm:$0xff]
    %v31 = vld [vmem:[%s1 + $0x40] sm:$0xff]
    %v32 = vld [vmem:[%s1 + $0x48] sm:$0xff]
    %v33 = vld [vmem:[%s1 + $0x50] sm:$0xff]
    %v34 = vld [vmem:[%s1 + $0x58] sm:$0xff]
    %v35 = vld [vmem:[%s1 + $0x60] sm:$0xff]
    %v36 = vld [vmem:[%s1 + $0x68] sm:$0xff]
    %v37 = vld [vmem:[%s1 + $0x70] sm:$0xff]
    %v38 = vld [vmem:[%s1 + $0x78] sm:$0xff]
    %v39 = vld [vmem:[%s1 + $0x80] sm:$0xff]
    %v40 = vld [vmem:[%s1 + $0x88] sm:$0xff]
    %v41 = vld [vmem:[%s1 + $0x90] sm:$0xff]
    %v42 = vld [vmem:[%s1 + $0x98] sm:$0xff]
    %v43 = vld [vmem:[%s1 + $0xa0] sm:$0xff]
    %v44 = vld [vmem:[%s1 + $0xa8] sm:$0xff]
    %v45 = vld [vmem:[%s1 + $0xb0] sm:$0xff]
    %v46 = vld [vmem:[%s1 + $0xb8] sm:$0xff]
    %v47 = vld [vmem:[%s1 + $0xc0] sm:$0xff]
    %v48 = vld [vmem:[%s1 + $0xc8] sm:$0xff]
    %v49 = vld [vmem:[%s1 + $0xd0] sm:$0xff]
    %v50 = vld [vmem:[%s1 + $0xd8] sm:$0xff]
    %v51 = vld [vmem:[%s1 + $0xe0] sm:$0xff]
    %v52 = vld [vmem:[%s1 + $0xe8] sm:$0xff]
    %v53 = vld [vmem:[%s1 + $0xf0] sm:$0xff]
    %v54 = vld [vmem:[%s1 + $0xf8] sm:$0xff]
    %v55 = vld [vmem:[%s1 + $0x100] sm:$0xff]
    %v56 = vld [vmem:[%s1 + $0x108] sm:$0xff]
    %v57 = vld [vmem:[%s1 + $0x110] sm:$0xff]
    %v58 = vld [vmem:[%s1 + $0x118] sm:$0xff]
    %v59 = vld [vmem:[%s1 + $0x120] sm:$0xff]
    %v60 = vld [vmem:[%s1 + $0x128] sm:$0xff]
    %v61 = vld [vmem:[%s1 + $0x130] sm:$0xff]
    %v62 = vld [vmem:[%s1 + $0x138] sm:$0xff]
    %v63 = vld [vmem:[%s1 + $0x140] sm:$0xff]
    %v64 = vld [vmem:[%s1 + $0x148] sm:$0xff]
    %v65 = vld [vmem:[%s1 + $0x150] sm:$0xff]
    %v66 = vld [vmem:[%s1 + $0x158] sm:$0xff]
    %v67 = vld [vmem:[%s1 + $0x160] sm:$0xff]
    %v68 = vld [vmem:[%s1 + $0x168] sm:$0xff]
    %v69 = vld [vmem:[%s1 + $0x170] sm:$0xff]
    %v70 = vld [vmem:[%s1 + $0x178] sm:$0xff]
    %v71 = vld [vmem:[%s1 + $0x180] sm:$0xff]
    %v72 = vld [vmem:[%s1 + $0x188] sm:$0xff]
    %v73 = vld [vmem:[%s1 + $0x190] sm:$0xff]
    %v74 = vld [vmem:[%s1 + $0x198] sm:$0xff]
    %v75 = vld [vmem:[%s1 + $0x1a0] sm:$0xff]
    %v76 = vld [vmem:[%s1 + $0x1a8] sm:$0xff]
    %v77 = vld [vmem:[%s1 + $0x1b0] sm:$0xff]
    %v78 = vld [vmem:[%s1 + $0x1b8] sm:$0xff]
    %v79 = vld [vmem:[%s1 + $0x1c0] sm:$0xff]
    %v80 = vld [vmem:[%s1 + $0x1c8] sm:$0xff]
    %v81 = vld [vmem:[%s1 + $0x1d0] sm:$0xff]
    %v82 = vld [vmem:[%s1 + $0x1d8] sm:$0xff]
    %v83 = vld [vmem:[%s1 + $0x1e0] sm:$0xff]
    %v84 = vld [vmem:[%s1 + $0x1e8] sm:$0xff]
    %v85 = vld [vmem:[%s1 + $0x1f0] sm:$0xff]
    %v86 = vld [vmem:[%s1 + $0x1f8] sm:$0xff]
    %v87 = vld [vmem:[%s1 + $0x200] sm:$0xff]
    %v88 = vld [vmem:[%s1 + $0x208] sm:$0xff]
    %v89 = vld [vmem:[%s1 + $0x210] sm:$0xff]
    %v90 = vld [vmem:[%s1 + $0x218] sm:$0xff]
    %v91 = vld [vmem:[%s1 + $0x220] sm:$0xff]
    %v92 = vld [vmem:[%s1 + $0x228] sm:$0xff]
    %v93 = vld [vmem:[%s1 + $0x230] sm:$0xff]
    %v94 = vld [vmem:[%s1 + $0x238] sm:$0xff]
    %v95 = vld [vmem:[%s1 + $0x240] sm:$0xff]
    %v96 = vld [vmem:[%s1 + $0x248] sm:$0xff]
    %v97 = vld [vmem:[%s1 + $0x250] sm:$0xff]
    %v98 = vld [vmem:[%s1 + $0x258] sm:$0xff]
    %v99 = vld [vmem:[%s1 + $0x260] sm:$0xff]
    %v100 = vld [vmem:[%s1 + $0x268] sm:$0xff]
    %v101 = vld [vmem:[%s1 + $0x270] sm:$0xff]
    %v102 = vld [vmem:[%s1 + $0x278] sm:$0xff]
    %v103 = vld [vmem:[%s1 + $0x280] sm:$0xff]
    %v104 = vld [vmem:[%s1 + $0x288] sm:$0xff]
    %v105 = vld [vmem:[%s1 + $0x290] sm:$0xff]
    %v106 = vld [vmem:[%s1 + $0x298] sm:$0xff]
    %v107 = vld [vmem:[%s1 + $0x2a0] sm:$0xff]
    %v108 = vld [vmem:[%s1 + $0x2a8] sm:$0xff]
    %v109 = vld [vmem:[%s1 + $0x2b0] sm:$0xff]
    %v110 = vld [vmem:[%s1 + $0x2b8] sm:$0xff]
    %v111 = vld [vmem:[%s1 + $0x2c0] sm:$0xff]
    %v112 = vld [vmem:[%s1 + $0x2c8] sm:$0xff]
    %v113 = vld [vmem:[%s1 + $0x2d0] sm:$0xff]
    %v114 = vld [vmem:[%s1 + $0x2d8] sm:$0xff]
    %v115 = vld [vmem:[%s1 + $0x2e0] sm:$0xff]
    %v116 = vld [vmem:[%s1 + $0x2e8] sm:$0xff]
    %v117 = vld [vmem:[%s1 + $0x2f0] sm:$0xff]
    %v118 = vld [vmem:[%s1 + $0x2f8] sm:$0xff]
    %v119 = vld [vmem:[%s1 + $0x300] sm:$0xff]
    %v120 = vld [vmem:[%s1 + $0x308] sm:$0xff]
    %v121 = vld [vmem:[%s1 + $0x310] sm:$0xff]
    %v122 = vld [vmem:[%s1 + $0x318] sm:$0xff]
    %v123 = vld [vmem:[%s1 + $0x320] sm:$0xff]
    %v124 = vld [vmem:[%s1 + $0x328] sm:$0xff]
    %v125 = vld [vmem:[%s1 + $0x330] sm:$0xff]
    %v126 = vld [vmem:[%s1 + $0x338] sm:$0xff]
    %v127 = vld [vmem:[%s1 + $0x340] sm:$0xff]
    %v128 = vld [vmem:[%s1 + $0x348] sm:$0xff]
    %v129 = vld [vmem:[%s1 + $0x350] sm:$0xff]
    %v130 = vld [vmem:[%s1 + $0x358] sm:$0xff]
    %v131 = vld [vmem:[%s1 + $0x360] sm:$0xff]
    %v132 = vld [vmem:[%s1 + $0x368] sm:$0xff]
    %v133 = vld [vmem:[%s1 + $0x370] sm:$0xff]
    %v134 = vld [vmem:[%s1 + $0x378] sm:$0xff]
    %v135 = vld [vmem:[%s1 + $0x380] sm:$0xff]
    %v136 = vld [vmem:[%s1 + $0x388] sm:$0xff]
    %v137 = vld [vmem:[%s1 + $0x390] sm:$0xff]
    %v138 = vld [vmem:[%s1 + $0x398] sm:$0xff]
    %v139 = vld [vmem:[%s1 + $0x3a0] sm:$0xff]
    %v140 = vld [vmem:[%s1 + $0x3a8] sm:$0xff]
    %v141 = vld [vmem:[%s1 + $0x3b0] sm:$0xff]
    %v142 = vld [vmem:[%s1 + $0x3b8] sm:$0xff]
    %v143 = vld [vmem:[%s1 + $0x3c0] sm:$0xff]
    %v144 = vld [vmem:[%s1 + $0x3c8] sm:$0xff]
    %v145 = vld [vmem:[%s1 + $0x3d0] sm:$0xff]
    %v146 = vld [vmem:[%s1 + $0x3d8] sm:$0xff]
    %v147 = vld [vmem:[%s1 + $0x3e0] sm:$0xff]
    %v148 = vld [vmem:[%s1 + $0x3e8] sm:$0xff]
    %v149 = vld [vmem:[%s1 + $0x3f0] sm:$0xff]
    %v150 = vld [vmem:[%s1 + $0x3f8] sm:$0xff]
    %v151 = vld [vmem:[%s1 + $0x400] sm:$0xff]
    %v152 = vld [vmem:[%s1 + $0x408] sm:$0xff]
    %v153 = vld [vmem:[%s1 + $0x410] sm:$0xff]
    %v154 = vld [vmem:[%s1 + $0x418] sm:$0xff]
    %v155 = vld [vmem:[%s1 + $0x420] sm:$0xff]
    %v156 = vld [vmem:[%s1 + $0x428] sm:$0xff]
    %v157 = vld [vmem:[%s1 + $0x430] sm:$0xff]
    %v158 = vld [vmem:[%s1 + $0x438] sm:$0xff]
    %v159 = vld [vmem:[%s1 + $0x440] sm:$0xff]
    %v160 = vld [vmem:[%s1 + $0x448] sm:$0xff]
    %v161 = vld [vmem:[%s1 + $0x450] sm:$0xff]
    %v162 = vld [vmem:[%s1 + $0x458] sm:$0xff]
    %v163 = vld [vmem:[%s1 + $0x460] sm:$0xff]
    %v164 = vld [vmem:[%s1 + $0x468] sm:$0xff]
    %v165 = vld [vmem:[%s1 + $0x470] sm:$0xff]
    %v166 = vld [vmem:[%s1 + $0x478] sm:$0xff]
    %v167 = vld [vmem:[%s1 + $0x480] sm:$0xff]
    %v168 = vld [vmem:[%s1 + $0x488] sm:$0xff]
    %v169 = vld [vmem:[%s1 + $0x490] sm:$0xff]
    %v170 = vld [vmem:[%s1 + $0x498] sm:$0xff]
    %v171 = vld [vmem:[%s1 + $0x4a0] sm:$0xff]
    %v172 = vld [vmem:[%s1 + $0x4a8] sm:$0xff]
    %v173 = vld [vmem:[%s1 + $0x4b0] sm:$0xff]
    %v174 = vld [vmem:[%s1 + $0x4b8] sm:$0xff]
    %v175 = vld [vmem:[%s1 + $0x4c0] sm:$0xff]
    %v176 = vld [vmem:[%s1 + $0x4c8] sm:$0xff]
    %v177 = vld [vmem:[%s1 + $0x4d0] sm:$0xff]
    %v178 = vld [vmem:[%s1 + $0x4d8] sm:$0xff]
    %v179 = vld [vmem:[%s1 + $0x4e0] sm:$0xff]
    %v180 = vld [vmem:[%s1 + $0x4e8] sm:$0xff]
    %v181 = vld [vmem:[%s1 + $0x4f0] sm:$0xff]
    %v182 = vld [vmem:[%s1 + $0x4f8] sm:$0xff]
    %v184 = vlaneseq
    %v185 = vshrl.u32 %v184, 7
    %v186 = vsub.s32 0, %v185
    %v187 = vrot.slane %v22, %v186
    %v188 = vlaneseq
    %v189 = vshrl.u32 %v188, 7
    %v190 = vsub.s32 1, %v189
    %v191 = vrot.slane %v22, %v190
    %v192 = vlaneseq
    %v193 = vshrl.u32 %v192, 7
    %v194 = vsub.s32 2, %v193
    %v195 = vrot.slane %v22, %v194
    %v196 = vlaneseq
    %v197 = vshrl.u32 %v196, 7
    %v198 = vsub.s32 3, %v197
    %v199 = vrot.slane %v22, %v198
    %v200 = vlaneseq
    %v201 = vshrl.u32 %v200, 7
    %v202 = vsub.s32 4, %v201
    %v203 = vrot.slane %v22, %v202
    %v204 = vlaneseq
    %v205 = vshrl.u32 %v204, 7
    %v206 = vsub.s32 5, %v205
    %v207 = vrot.slane %v22, %v206
    %v208 = vlaneseq
    %v209 = vshrl.u32 %v208, 7
    %v210 = vsub.s32 6, %v209
    %v211 = vrot.slane %v22, %v210
    %v212 = vlaneseq
    %v213 = vshrl.u32 %v212, 7
    %v214 = vsub.s32 7, %v213
    %v215 = vrot.slane %v22, %v214
    %v224 = vmul.f32 %v23, %v187
    %v225 = vmul.f32 %v24, %v191
    %v226 = vmul.f32 %v25, %v195
    %v227 = vmul.f32 %v26, %v199
    %v228 = vmul.f32 %v27, %v203
    %v229 = vmul.f32 %v28, %v207
    %v230 = vmul.f32 %v29, %v211
    %v231 = vmul.f32 %v30, %v215
    %v232 = vmul.f32 %v31, %v187
    %v233 = vmul.f32 %v32, %v191
    %v234 = vmul.f32 %v33, %v195
    %v235 = vmul.f32 %v34, %v199
    %v236 = vmul.f32 %v35, %v203
    %v237 = vmul.f32 %v36, %v207
    %v238 = vmul.f32 %v37, %v211
    %v239 = vmul.f32 %v38, %v215
    %v240 = vmul.f32 %v39, %v187
    %v241 = vmul.f32 %v40, %v191
    %v242 = vmul.f32 %v41, %v195
    %v243 = vmul.f32 %v42, %v199
    %v244 = vmul.f32 %v43, %v203
    %v245 = vmul.f32 %v44, %v207
    %v246 = vmul.f32 %v45, %v211
    %v247 = vmul.f32 %v46, %v215
    %v248 = vmul.f32 %v47, %v187
    %v249 = vmul.f32 %v48, %v191
    %v250 = vmul.f32 %v49, %v195
    %v251 = vmul.f32 %v50, %v199
    %v252 = vmul.f32 %v51, %v203
    %v253 = vmul.f32 %v52, %v207
    %v254 = vmul.f32 %v53, %v211
    %v255 = vmul.f32 %v54, %v215
    %v256 = vmul.f32 %v55, %v187
    %v257 = vmul.f32 %v56, %v191
    %v258 = vmul.f32 %v57, %v195
    %v259 = vmul.f32 %v58, %v199
    %v260 = vmul.f32 %v59, %v203
    %v261 = vmul.f32 %v60, %v207
    %v262 = vmul.f32 %v61, %v211
    %v263 = vmul.f32 %v62, %v215
    %v264 = vmul.f32 %v63, %v187
    %v265 = vmul.f32 %v64, %v191
    %v266 = vmul.f32 %v65, %v195
    %v267 = vmul.f32 %v66, %v199
    %v268 = vmul.f32 %v67, %v203
    %v269 = vmul.f32 %v68, %v207
    %v270 = vmul.f32 %v69, %v211
    %v271 = vmul.f32 %v70, %v215
    %v272 = vmul.f32 %v71, %v187
    %v273 = vmul.f32 %v72, %v191
    %v274 = vmul.f32 %v73, %v195
    %v275 = vmul.f32 %v74, %v199
    %v276 = vmul.f32 %v75, %v203
    %v277 = vmul.f32 %v76, %v207
    %v278 = vmul.f32 %v77, %v211
    %v279 = vmul.f32 %v78, %v215
    %v280 = vmul.f32 %v79, %v187
    %v281 = vmul.f32 %v80, %v191
    %v282 = vmul.f32 %v81, %v195
    %v283 = vmul.f32 %v82, %v199
    %v284 = vmul.f32 %v83, %v203
    %v285 = vmul.f32 %v84, %v207
    %v286 = vmul.f32 %v85, %v211
    %v287 = vmul.f32 %v86, %v215
    %v288 = vmul.f32 %v87, %v187
    %v289 = vmul.f32 %v88, %v191
    %v290 = vmul.f32 %v89, %v195
    %v291 = vmul.f32 %v90, %v199
    %v292 = vmul.f32 %v91, %v203
    %v293 = vmul.f32 %v92, %v207
    %v294 = vmul.f32 %v93, %v211
    %v295 = vmul.f32 %v94, %v215
    %v296 = vmul.f32 %v95, %v187
    %v297 = vmul.f32 %v96, %v191
    %v298 = vmul.f32 %v97, %v195
    %v299 = vmul.f32 %v98, %v199
    %v300 = vmul.f32 %v99, %v203
    %v301 = vmul.f32 %v100, %v207
    %v302 = vmul.f32 %v101, %v211
    %v303 = vmul.f32 %v102, %v215
    %v304 = vmul.f32 %v103, %v187
    %v305 = vmul.f32 %v104, %v191
    %v306 = vmul.f32 %v105, %v195
    %v307 = vmul.f32 %v106, %v199
    %v308 = vmul.f32 %v107, %v203
    %v309 = vmul.f32 %v108, %v207
    %v310 = vmul.f32 %v109, %v211
    %v311 = vmul.f32 %v110, %v215
    %v312 = vmul.f32 %v111, %v187
    %v313 = vmul.f32 %v112, %v191
    %v314 = vmul.f32 %v113, %v195
    %v315 = vmul.f32 %v114, %v199
    %v316 = vmul.f32 %v115, %v203
    %v317 = vmul.f32 %v116, %v207
    %v318 = vmul.f32 %v117, %v211
    %v319 = vmul.f32 %v118, %v215
    %v320 = vmul.f32 %v119, %v187
    %v321 = vmul.f32 %v120, %v191
    %v322 = vmul.f32 %v121, %v195
    %v323 = vmul.f32 %v122, %v199
    %v324 = vmul.f32 %v123, %v203
    %v325 = vmul.f32 %v124, %v207
    %v326 = vmul.f32 %v125, %v211
    %v327 = vmul.f32 %v126, %v215
    %v328 = vmul.f32 %v127, %v187
    %v329 = vmul.f32 %v128, %v191
    %v330 = vmul.f32 %v129, %v195
    %v331 = vmul.f32 %v130, %v199
    %v332 = vmul.f32 %v131, %v203
    %v333 = vmul.f32 %v132, %v207
    %v334 = vmul.f32 %v133, %v211
    %v335 = vmul.f32 %v134, %v215
    %v336 = vmul.f32 %v135, %v187
    %v337 = vmul.f32 %v136, %v191
    %v338 = vmul.f32 %v137, %v195
    %v339 = vmul.f32 %v138, %v199
    %v340 = vmul.f32 %v139, %v203
    %v341 = vmul.f32 %v140, %v207
    %v342 = vmul.f32 %v141, %v211
    %v343 = vmul.f32 %v142, %v215
    %v344 = vmul.f32 %v143, %v187
    %v345 = vmul.f32 %v144, %v191
    %v346 = vmul.f32 %v145, %v195
    %v347 = vmul.f32 %v146, %v199
    %v348 = vmul.f32 %v147, %v203
    %v349 = vmul.f32 %v148, %v207
    %v350 = vmul.f32 %v149, %v211
    %v351 = vmul.f32 %v150, %v215
    %v352 = vmul.f32 %v151, %v187
    %v353 = vmul.f32 %v152, %v191
    %v354 = vmul.f32 %v153, %v195
    %v355 = vmul.f32 %v154, %v199
    %v356 = vmul.f32 %v155, %v203
    %v357 = vmul.f32 %v156, %v207
    %v358 = vmul.f32 %v157, %v211
    %v359 = vmul.f32 %v158, %v215
    %v360 = vmul.f32 %v159, %v187
    %v361 = vmul.f32 %v160, %v191
    %v362 = vmul.f32 %v161, %v195
    %v363 = vmul.f32 %v162, %v199
    %v364 = vmul.f32 %v163, %v203
    %v365 = vmul.f32 %v164, %v207
    %v366 = vmul.f32 %v165, %v211
    %v367 = vmul.f32 %v166, %v215
    %v368 = vmul.f32 %v167, %v187
    %v369 = vmul.f32 %v168, %v191
    %v370 = vmul.f32 %v169, %v195
    %v371 = vmul.f32 %v170, %v199
    %v372 = vmul.f32 %v171, %v203
    %v373 = vmul.f32 %v172, %v207
    %v374 = vmul.f32 %v173, %v211
    %v375 = vmul.f32 %v174, %v215
    %v376 = vmul.f32 %v175, %v187
    %v377 = vmul.f32 %v176, %v191
    %v378 = vmul.f32 %v177, %v195
    %v379 = vmul.f32 %v178, %v199
    %v380 = vmul.f32 %v179, %v203
    %v381 = vmul.f32 %v180, %v207
    %v382 = vmul.f32 %v181, %v211
    %v383 = vmul.f32 %v182, %v215
    %v384 = vpack.c.bf16 %v232, %v224
    %v385 = vpack.c.bf16 %v233, %v225
    %v386 = vpack.c.bf16 %v234, %v226
    %v387 = vpack.c.bf16 %v235, %v227
    %v388 = vpack.c.bf16 %v236, %v228
    %v389 = vpack.c.bf16 %v237, %v229
    %v390 = vpack.c.bf16 %v238, %v230
    %v391 = vpack.c.bf16 %v239, %v231
    %v392 = vpack.c.bf16 %v248, %v240
    %v393 = vpack.c.bf16 %v249, %v241
    %v394 = vpack.c.bf16 %v250, %v242
    %v395 = vpack.c.bf16 %v251, %v243
    %v396 = vpack.c.bf16 %v252, %v244
    %v397 = vpack.c.bf16 %v253, %v245
    %v398 = vpack.c.bf16 %v254, %v246
    %v399 = vpack.c.bf16 %v255, %v247
    %v400 = vpack.c.bf16 %v264, %v256
    %v401 = vpack.c.bf16 %v265, %v257
    %v402 = vpack.c.bf16 %v266, %v258
    %v403 = vpack.c.bf16 %v267, %v259
    %v404 = vpack.c.bf16 %v268, %v260
    %v405 = vpack.c.bf16 %v269, %v261
    %v406 = vpack.c.bf16 %v270, %v262
    %v407 = vpack.c.bf16 %v271, %v263
    %v408 = vpack.c.bf16 %v280, %v272
    %v409 = vpack.c.bf16 %v281, %v273
    %v410 = vpack.c.bf16 %v282, %v274
    %v411 = vpack.c.bf16 %v283, %v275
    %v412 = vpack.c.bf16 %v284, %v276
    %v413 = vpack.c.bf16 %v285, %v277
    %v414 = vpack.c.bf16 %v286, %v278
    %v415 = vpack.c.bf16 %v287, %v279
    %v416 = vpack.c.bf16 %v296, %v288
    %v417 = vpack.c.bf16 %v297, %v289
    %v418 = vpack.c.bf16 %v298, %v290
    %v419 = vpack.c.bf16 %v299, %v291
    %v420 = vpack.c.bf16 %v300, %v292
    %v421 = vpack.c.bf16 %v301, %v293
    %v422 = vpack.c.bf16 %v302, %v294
    %v423 = vpack.c.bf16 %v303, %v295
    %v424 = vpack.c.bf16 %v312, %v304
    %v425 = vpack.c.bf16 %v313, %v305
    %v426 = vpack.c.bf16 %v314, %v306
    %v427 = vpack.c.bf16 %v315, %v307
    %v428 = vpack.c.bf16 %v316, %v308
    %v429 = vpack.c.bf16 %v317, %v309
    %v430 = vpack.c.bf16 %v318, %v310
    %v431 = vpack.c.bf16 %v319, %v311
    %v432 = vpack.c.bf16 %v328, %v320
    %v433 = vpack.c.bf16 %v329, %v321
    %v434 = vpack.c.bf16 %v330, %v322
    %v435 = vpack.c.bf16 %v331, %v323
    %v436 = vpack.c.bf16 %v332, %v324
    %v437 = vpack.c.bf16 %v333, %v325
    %v438 = vpack.c.bf16 %v334, %v326
    %v439 = vpack.c.bf16 %v335, %v327
    %v440 = vpack.c.bf16 %v344, %v336
    %v441 = vpack.c.bf16 %v345, %v337
    %v442 = vpack.c.bf16 %v346, %v338
    %v443 = vpack.c.bf16 %v347, %v339
    %v444 = vpack.c.bf16 %v348, %v340
    %v445 = vpack.c.bf16 %v349, %v341
    %v446 = vpack.c.bf16 %v350, %v342
    %v447 = vpack.c.bf16 %v351, %v343
    %v448 = vpack.c.bf16 %v360, %v352
    %v449 = vpack.c.bf16 %v361, %v353
    %v450 = vpack.c.bf16 %v362, %v354
    %v451 = vpack.c.bf16 %v363, %v355
    %v452 = vpack.c.bf16 %v364, %v356
    %v453 = vpack.c.bf16 %v365, %v357
    %v454 = vpack.c.bf16 %v366, %v358
    %v455 = vpack.c.bf16 %v367, %v359
    %v456 = vpack.c.bf16 %v376, %v368
    %v457 = vpack.c.bf16 %v377, %v369
    %v458 = vpack.c.bf16 %v378, %v370
    %v459 = vpack.c.bf16 %v379, %v371
    %v460 = vpack.c.bf16 %v380, %v372
    %v461 = vpack.c.bf16 %v381, %v373
    %v462 = vpack.c.bf16 %v382, %v374
    %v463 = vpack.c.bf16 %v383, %v375
    %v464 = vld [vmem:[%s2] sm:$0xff]
    %v465 = vld [vmem:[%s2 + $0x8] sm:$0xff]
    %v466 = vld [vmem:[%s2 + $0x10] sm:$0xff]
    %v467 = vld [vmem:[%s2 + $0x18] sm:$0xff]
    %v468 = vld [vmem:[%s2 + $0x20] sm:$0xff]
    %v469 = vld [vmem:[%s2 + $0x28] sm:$0xff]
    %v470 = vld [vmem:[%s2 + $0x30] sm:$0xff]
    %v471 = vld [vmem:[%s2 + $0x38] sm:$0xff]
    %v472 = vld [vmem:[%s2 + $0x40] sm:$0xff]
    %v473 = vld [vmem:[%s2 + $0x48] sm:$0xff]
    %v474 = vld [vmem:[%s2 + $0x50] sm:$0xff]
    %v475 = vld [vmem:[%s2 + $0x58] sm:$0xff]
    %v476 = vld [vmem:[%s2 + $0x60] sm:$0xff]
    %v477 = vld [vmem:[%s2 + $0x68] sm:$0xff]
    %v478 = vld [vmem:[%s2 + $0x70] sm:$0xff]
    %v479 = vld [vmem:[%s2 + $0x78] sm:$0xff]
    %v480 = vld [vmem:[%s2 + $0x80] sm:$0xff]
    %v481 = vld [vmem:[%s2 + $0x88] sm:$0xff]
    %v482 = vld [vmem:[%s2 + $0x90] sm:$0xff]
    %v483 = vld [vmem:[%s2 + $0x98] sm:$0xff]
    %v484 = vld [vmem:[%s2 + $0xa0] sm:$0xff]
    %v485 = vld [vmem:[%s2 + $0xa8] sm:$0xff]
    %v486 = vld [vmem:[%s2 + $0xb0] sm:$0xff]
    %v487 = vld [vmem:[%s2 + $0xb8] sm:$0xff]
    %v488 = vld [vmem:[%s2 + $0xc0] sm:$0xff]
    %v489 = vld [vmem:[%s2 + $0xc8] sm:$0xff]
    %v490 = vld [vmem:[%s2 + $0xd0] sm:$0xff]
    %v491 = vld [vmem:[%s2 + $0xd8] sm:$0xff]
    %v492 = vld [vmem:[%s2 + $0xe0] sm:$0xff]
    %v493 = vld [vmem:[%s2 + $0xe8] sm:$0xff]
    %v494 = vld [vmem:[%s2 + $0xf0] sm:$0xff]
    %v495 = vld [vmem:[%s2 + $0xf8] sm:$0xff]
    %v496 = vld [vmem:[%s2 + $0x100] sm:$0xff]
    %v497 = vld [vmem:[%s2 + $0x108] sm:$0xff]
    %v498 = vld [vmem:[%s2 + $0x110] sm:$0xff]
    %v499 = vld [vmem:[%s2 + $0x118] sm:$0xff]
    %v500 = vld [vmem:[%s2 + $0x120] sm:$0xff]
    %v501 = vld [vmem:[%s2 + $0x128] sm:$0xff]
    %v502 = vld [vmem:[%s2 + $0x130] sm:$0xff]
    %v503 = vld [vmem:[%s2 + $0x138] sm:$0xff]
    %v504 = vld [vmem:[%s2 + $0x140] sm:$0xff]
    %v505 = vld [vmem:[%s2 + $0x148] sm:$0xff]
    %v506 = vld [vmem:[%s2 + $0x150] sm:$0xff]
    %v507 = vld [vmem:[%s2 + $0x158] sm:$0xff]
    %v508 = vld [vmem:[%s2 + $0x160] sm:$0xff]
    %v509 = vld [vmem:[%s2 + $0x168] sm:$0xff]
    %v510 = vld [vmem:[%s2 + $0x170] sm:$0xff]
    %v511 = vld [vmem:[%s2 + $0x178] sm:$0xff]
    %v512 = vld [vmem:[%s2 + $0x180] sm:$0xff]
    %v513 = vld [vmem:[%s2 + $0x188] sm:$0xff]
    %v514 = vld [vmem:[%s2 + $0x190] sm:$0xff]
    %v515 = vld [vmem:[%s2 + $0x198] sm:$0xff]
    %v516 = vld [vmem:[%s2 + $0x1a0] sm:$0xff]
    %v517 = vld [vmem:[%s2 + $0x1a8] sm:$0xff]
    %v518 = vld [vmem:[%s2 + $0x1b0] sm:$0xff]
    %v519 = vld [vmem:[%s2 + $0x1b8] sm:$0xff]
    %v520 = vld [vmem:[%s2 + $0x1c0] sm:$0xff]
    %v521 = vld [vmem:[%s2 + $0x1c8] sm:$0xff]
    %v522 = vld [vmem:[%s2 + $0x1d0] sm:$0xff]
    %v523 = vld [vmem:[%s2 + $0x1d8] sm:$0xff]
    %v524 = vld [vmem:[%s2 + $0x1e0] sm:$0xff]
    %v525 = vld [vmem:[%s2 + $0x1e8] sm:$0xff]
    %v526 = vld [vmem:[%s2 + $0x1f0] sm:$0xff]
    %v527 = vld [vmem:[%s2 + $0x1f8] sm:$0xff]
    %v528 = vld [vmem:[%s2 + $0x200] sm:$0xff]
    %v529 = vld [vmem:[%s2 + $0x208] sm:$0xff]
    %v530 = vld [vmem:[%s2 + $0x210] sm:$0xff]
    %v531 = vld [vmem:[%s2 + $0x218] sm:$0xff]
    %v532 = vld [vmem:[%s2 + $0x220] sm:$0xff]
    %v533 = vld [vmem:[%s2 + $0x228] sm:$0xff]
    %v534 = vld [vmem:[%s2 + $0x230] sm:$0xff]
    %v535 = vld [vmem:[%s2 + $0x238] sm:$0xff]
    %v536 = vld [vmem:[%s2 + $0x240] sm:$0xff]
    %v537 = vld [vmem:[%s2 + $0x248] sm:$0xff]
    %v538 = vld [vmem:[%s2 + $0x250] sm:$0xff]
    %v539 = vld [vmem:[%s2 + $0x258] sm:$0xff]
    %v540 = vld [vmem:[%s2 + $0x260] sm:$0xff]
    %v541 = vld [vmem:[%s2 + $0x268] sm:$0xff]
    %v542 = vld [vmem:[%s2 + $0x270] sm:$0xff]
    %v543 = vld [vmem:[%s2 + $0x278] sm:$0xff]
    %v544 = vld [vmem:[%s2 + $0x280] sm:$0xff]
    %v545 = vld [vmem:[%s2 + $0x288] sm:$0xff]
    %v546 = vld [vmem:[%s2 + $0x290] sm:$0xff]
    %v547 = vld [vmem:[%s2 + $0x298] sm:$0xff]
    %v548 = vld [vmem:[%s2 + $0x2a0] sm:$0xff]
    %v549 = vld [vmem:[%s2 + $0x2a8] sm:$0xff]
    %v550 = vld [vmem:[%s2 + $0x2b0] sm:$0xff]
    %v551 = vld [vmem:[%s2 + $0x2b8] sm:$0xff]
    %v552 = vld [vmem:[%s2 + $0x2c0] sm:$0xff]
    %v553 = vld [vmem:[%s2 + $0x2c8] sm:$0xff]
    %v554 = vld [vmem:[%s2 + $0x2d0] sm:$0xff]
    %v555 = vld [vmem:[%s2 + $0x2d8] sm:$0xff]
    %v556 = vld [vmem:[%s2 + $0x2e0] sm:$0xff]
    %v557 = vld [vmem:[%s2 + $0x2e8] sm:$0xff]
    %v558 = vld [vmem:[%s2 + $0x2f0] sm:$0xff]
    %v559 = vld [vmem:[%s2 + $0x2f8] sm:$0xff]
    %v560 = vld [vmem:[%s2 + $0x300] sm:$0xff]
    %v561 = vld [vmem:[%s2 + $0x308] sm:$0xff]
    %v562 = vld [vmem:[%s2 + $0x310] sm:$0xff]
    %v563 = vld [vmem:[%s2 + $0x318] sm:$0xff]
    %v564 = vld [vmem:[%s2 + $0x320] sm:$0xff]
    %v565 = vld [vmem:[%s2 + $0x328] sm:$0xff]
    %v566 = vld [vmem:[%s2 + $0x330] sm:$0xff]
    %v567 = vld [vmem:[%s2 + $0x338] sm:$0xff]
    %v568 = vld [vmem:[%s2 + $0x340] sm:$0xff]
    %v569 = vld [vmem:[%s2 + $0x348] sm:$0xff]
    %v570 = vld [vmem:[%s2 + $0x350] sm:$0xff]
    %v571 = vld [vmem:[%s2 + $0x358] sm:$0xff]
    %v572 = vld [vmem:[%s2 + $0x360] sm:$0xff]
    %v573 = vld [vmem:[%s2 + $0x368] sm:$0xff]
    %v574 = vld [vmem:[%s2 + $0x370] sm:$0xff]
    %v575 = vld [vmem:[%s2 + $0x378] sm:$0xff]
    %v576 = vld [vmem:[%s2 + $0x380] sm:$0xff]
    %v577 = vld [vmem:[%s2 + $0x388] sm:$0xff]
    %v578 = vld [vmem:[%s2 + $0x390] sm:$0xff]
    %v579 = vld [vmem:[%s2 + $0x398] sm:$0xff]
    %v580 = vld [vmem:[%s2 + $0x3a0] sm:$0xff]
    %v581 = vld [vmem:[%s2 + $0x3a8] sm:$0xff]
    %v582 = vld [vmem:[%s2 + $0x3b0] sm:$0xff]
    %v583 = vld [vmem:[%s2 + $0x3b8] sm:$0xff]
    %v584 = vld [vmem:[%s2 + $0x3c0] sm:$0xff]
    %v585 = vld [vmem:[%s2 + $0x3c8] sm:$0xff]
    %v586 = vld [vmem:[%s2 + $0x3d0] sm:$0xff]
    %v587 = vld [vmem:[%s2 + $0x3d8] sm:$0xff]
    %v588 = vld [vmem:[%s2 + $0x3e0] sm:$0xff]
    %v589 = vld [vmem:[%s2 + $0x3e8] sm:$0xff]
    %v590 = vld [vmem:[%s2 + $0x3f0] sm:$0xff]
    %v591 = vld [vmem:[%s2 + $0x3f8] sm:$0xff]
    %v592 = vld [vmem:[%s2 + $0x400] sm:$0xff]
    %v593 = vld [vmem:[%s2 + $0x408] sm:$0xff]
    %v594 = vld [vmem:[%s2 + $0x410] sm:$0xff]
    %v595 = vld [vmem:[%s2 + $0x418] sm:$0xff]
    %v596 = vld [vmem:[%s2 + $0x420] sm:$0xff]
    %v597 = vld [vmem:[%s2 + $0x428] sm:$0xff]
    %v598 = vld [vmem:[%s2 + $0x430] sm:$0xff]
    %v599 = vld [vmem:[%s2 + $0x438] sm:$0xff]
    %v600 = vld [vmem:[%s2 + $0x440] sm:$0xff]
    %v601 = vld [vmem:[%s2 + $0x448] sm:$0xff]
    %v602 = vld [vmem:[%s2 + $0x450] sm:$0xff]
    %v603 = vld [vmem:[%s2 + $0x458] sm:$0xff]
    %v604 = vld [vmem:[%s2 + $0x460] sm:$0xff]
    %v605 = vld [vmem:[%s2 + $0x468] sm:$0xff]
    %v606 = vld [vmem:[%s2 + $0x470] sm:$0xff]
    %v607 = vld [vmem:[%s2 + $0x478] sm:$0xff]
    %v608 = vld [vmem:[%s2 + $0x480] sm:$0xff]
    %v609 = vld [vmem:[%s2 + $0x488] sm:$0xff]
    %v610 = vld [vmem:[%s2 + $0x490] sm:$0xff]
    %v611 = vld [vmem:[%s2 + $0x498] sm:$0xff]
    %v612 = vld [vmem:[%s2 + $0x4a0] sm:$0xff]
    %v613 = vld [vmem:[%s2 + $0x4a8] sm:$0xff]
    %v614 = vld [vmem:[%s2 + $0x4b0] sm:$0xff]
    %v615 = vld [vmem:[%s2 + $0x4b8] sm:$0xff]
    %v616 = vld [vmem:[%s2 + $0x4c0] sm:$0xff]
    %v617 = vld [vmem:[%s2 + $0x4c8] sm:$0xff]
    %v618 = vld [vmem:[%s2 + $0x4d0] sm:$0xff]
    %v619 = vld [vmem:[%s2 + $0x4d8] sm:$0xff]
    %v620 = vld [vmem:[%s2 + $0x4e0] sm:$0xff]
    %v621 = vld [vmem:[%s2 + $0x4e8] sm:$0xff]
    %v622 = vld [vmem:[%s2 + $0x4f0] sm:$0xff]
    %v623 = vld [vmem:[%s2 + $0x4f8] sm:$0xff]
    %v624 = vld [vmem:[%s2 + $0x500] sm:$0xff]
    %v625 = vld [vmem:[%s2 + $0x508] sm:$0xff]
    %v626 = vld [vmem:[%s2 + $0x510] sm:$0xff]
    %v627 = vld [vmem:[%s2 + $0x518] sm:$0xff]
    %v628 = vld [vmem:[%s2 + $0x520] sm:$0xff]
    %v629 = vld [vmem:[%s2 + $0x528] sm:$0xff]
    %v630 = vld [vmem:[%s2 + $0x530] sm:$0xff]
    %v631 = vld [vmem:[%s2 + $0x538] sm:$0xff]
    %v632 = vld [vmem:[%s2 + $0x540] sm:$0xff]
    %v633 = vld [vmem:[%s2 + $0x548] sm:$0xff]
    %v634 = vld [vmem:[%s2 + $0x550] sm:$0xff]
    %v635 = vld [vmem:[%s2 + $0x558] sm:$0xff]
    %v636 = vld [vmem:[%s2 + $0x560] sm:$0xff]
    %v637 = vld [vmem:[%s2 + $0x568] sm:$0xff]
    %v638 = vld [vmem:[%s2 + $0x570] sm:$0xff]
    %v639 = vld [vmem:[%s2 + $0x578] sm:$0xff]
    %v640 = vld [vmem:[%s2 + $0x580] sm:$0xff]
    %v641 = vld [vmem:[%s2 + $0x588] sm:$0xff]
    %v642 = vld [vmem:[%s2 + $0x590] sm:$0xff]
    %v643 = vld [vmem:[%s2 + $0x598] sm:$0xff]
    %v644 = vld [vmem:[%s2 + $0x5a0] sm:$0xff]
    %v645 = vld [vmem:[%s2 + $0x5a8] sm:$0xff]
    %v646 = vld [vmem:[%s2 + $0x5b0] sm:$0xff]
    %v647 = vld [vmem:[%s2 + $0x5b8] sm:$0xff]
    %v648 = vld [vmem:[%s2 + $0x5c0] sm:$0xff]
    %v649 = vld [vmem:[%s2 + $0x5c8] sm:$0xff]
    %v650 = vld [vmem:[%s2 + $0x5d0] sm:$0xff]
    %v651 = vld [vmem:[%s2 + $0x5d8] sm:$0xff]
    %v652 = vld [vmem:[%s2 + $0x5e0] sm:$0xff]
    %v653 = vld [vmem:[%s2 + $0x5e8] sm:$0xff]
    %v654 = vld [vmem:[%s2 + $0x5f0] sm:$0xff]
    %v655 = vld [vmem:[%s2 + $0x5f8] sm:$0xff]
    %v656 = vld [vmem:[%s2 + $0x600] sm:$0xff]
    %v657 = vld [vmem:[%s2 + $0x608] sm:$0xff]
    %v658 = vld [vmem:[%s2 + $0x610] sm:$0xff]
    %v659 = vld [vmem:[%s2 + $0x618] sm:$0xff]
    %v660 = vld [vmem:[%s2 + $0x620] sm:$0xff]
    %v661 = vld [vmem:[%s2 + $0x628] sm:$0xff]
    %v662 = vld [vmem:[%s2 + $0x630] sm:$0xff]
    %v663 = vld [vmem:[%s2 + $0x638] sm:$0xff]
    %v664 = vld [vmem:[%s2 + $0x640] sm:$0xff]
    %v665 = vld [vmem:[%s2 + $0x648] sm:$0xff]
    %v666 = vld [vmem:[%s2 + $0x650] sm:$0xff]
    %v667 = vld [vmem:[%s2 + $0x658] sm:$0xff]
    %v668 = vld [vmem:[%s2 + $0x660] sm:$0xff]
    %v669 = vld [vmem:[%s2 + $0x668] sm:$0xff]
    %v670 = vld [vmem:[%s2 + $0x670] sm:$0xff]
    %v671 = vld [vmem:[%s2 + $0x678] sm:$0xff]
    %v672 = vld [vmem:[%s2 + $0x680] sm:$0xff]
    %v673 = vld [vmem:[%s2 + $0x688] sm:$0xff]
    %v674 = vld [vmem:[%s2 + $0x690] sm:$0xff]
    %v675 = vld [vmem:[%s2 + $0x698] sm:$0xff]
    %v676 = vld [vmem:[%s2 + $0x6a0] sm:$0xff]
    %v677 = vld [vmem:[%s2 + $0x6a8] sm:$0xff]
    %v678 = vld [vmem:[%s2 + $0x6b0] sm:$0xff]
    %v679 = vld [vmem:[%s2 + $0x6b8] sm:$0xff]
    %v680 = vld [vmem:[%s2 + $0x6c0] sm:$0xff]
    %v681 = vld [vmem:[%s2 + $0x6c8] sm:$0xff]
    %v682 = vld [vmem:[%s2 + $0x6d0] sm:$0xff]
    %v683 = vld [vmem:[%s2 + $0x6d8] sm:$0xff]
    %v684 = vld [vmem:[%s2 + $0x6e0] sm:$0xff]
    %v685 = vld [vmem:[%s2 + $0x6e8] sm:$0xff]
    %v686 = vld [vmem:[%s2 + $0x6f0] sm:$0xff]
    %v687 = vld [vmem:[%s2 + $0x6f8] sm:$0xff]
    %v688 = vld [vmem:[%s2 + $0x700] sm:$0xff]
    %v689 = vld [vmem:[%s2 + $0x708] sm:$0xff]
    %v690 = vld [vmem:[%s2 + $0x710] sm:$0xff]
    %v691 = vld [vmem:[%s2 + $0x718] sm:$0xff]
    %v692 = vld [vmem:[%s2 + $0x720] sm:$0xff]
    %v693 = vld [vmem:[%s2 + $0x728] sm:$0xff]
    %v694 = vld [vmem:[%s2 + $0x730] sm:$0xff]
    %v695 = vld [vmem:[%s2 + $0x738] sm:$0xff]
    %v696 = vld [vmem:[%s2 + $0x740] sm:$0xff]
    %v697 = vld [vmem:[%s2 + $0x748] sm:$0xff]
    %v698 = vld [vmem:[%s2 + $0x750] sm:$0xff]
    %v699 = vld [vmem:[%s2 + $0x758] sm:$0xff]
    %v700 = vld [vmem:[%s2 + $0x760] sm:$0xff]
    %v701 = vld [vmem:[%s2 + $0x768] sm:$0xff]
    %v702 = vld [vmem:[%s2 + $0x770] sm:$0xff]
    %v703 = vld [vmem:[%s2 + $0x778] sm:$0xff]
    %v704 = vpack.c.bf16 %v466, %v464
    %v705 = vpack.c.bf16 %v467, %v465
    %v706 = vpack.c.bf16 %v470, %v468
    %v707 = vpack.c.bf16 %v471, %v469
    %v708 = vpack.c.bf16 %v474, %v472
    %v709 = vpack.c.bf16 %v475, %v473
    %v710 = vpack.c.bf16 %v478, %v476
    %v711 = vpack.c.bf16 %v479, %v477
    %v712 = vpack.c.bf16 %v482, %v480
    %v713 = vpack.c.bf16 %v483, %v481
    %v714 = vpack.c.bf16 %v486, %v484
    %v715 = vpack.c.bf16 %v487, %v485
    %v716 = vpack.c.bf16 %v490, %v488
    %v717 = vpack.c.bf16 %v491, %v489
    %v718 = vpack.c.bf16 %v494, %v492
    %v719 = vpack.c.bf16 %v495, %v493
    %v720 = vpack.c.bf16 %v498, %v496
    %v721 = vpack.c.bf16 %v499, %v497
    %v722 = vpack.c.bf16 %v502, %v500
    %v723 = vpack.c.bf16 %v503, %v501
    %v724 = vpack.c.bf16 %v506, %v504
    %v725 = vpack.c.bf16 %v507, %v505
    %v726 = vpack.c.bf16 %v510, %v508
    %v727 = vpack.c.bf16 %v511, %v509
    %v728 = vpack.c.bf16 %v514, %v512
    %v729 = vpack.c.bf16 %v515, %v513
    %v730 = vpack.c.bf16 %v518, %v516
    %v731 = vpack.c.bf16 %v519, %v517
    %v732 = vpack.c.bf16 %v522, %v520
    %v733 = vpack.c.bf16 %v523, %v521
    %v734 = vpack.c.bf16 %v526, %v524
    %v735 = vpack.c.bf16 %v527, %v525
    %v736 = vpack.c.bf16 %v530, %v528
    %v737 = vpack.c.bf16 %v531, %v529
    %v738 = vpack.c.bf16 %v534, %v532
    %v739 = vpack.c.bf16 %v535, %v533
    %v740 = vpack.c.bf16 %v538, %v536
    %v741 = vpack.c.bf16 %v539, %v537
    %v742 = vpack.c.bf16 %v542, %v540
    %v743 = vpack.c.bf16 %v543, %v541
    %v744 = vpack.c.bf16 %v546, %v544
    %v745 = vpack.c.bf16 %v547, %v545
    %v746 = vpack.c.bf16 %v550, %v548
    %v747 = vpack.c.bf16 %v551, %v549
    %v748 = vpack.c.bf16 %v554, %v552
    %v749 = vpack.c.bf16 %v555, %v553
    %v750 = vpack.c.bf16 %v558, %v556
    %v751 = vpack.c.bf16 %v559, %v557
    %v752 = vpack.c.bf16 %v562, %v560
    %v753 = vpack.c.bf16 %v563, %v561
    %v754 = vpack.c.bf16 %v566, %v564
    %v755 = vpack.c.bf16 %v567, %v565
    %v756 = vpack.c.bf16 %v570, %v568
    %v757 = vpack.c.bf16 %v571, %v569
    %v758 = vpack.c.bf16 %v574, %v572
    %v759 = vpack.c.bf16 %v575, %v573
    %v760 = vpack.c.bf16 %v578, %v576
    %v761 = vpack.c.bf16 %v579, %v577
    %v762 = vpack.c.bf16 %v582, %v580
    %v763 = vpack.c.bf16 %v583, %v581
    %v764 = vpack.c.bf16 %v586, %v584
    %v765 = vpack.c.bf16 %v587, %v585
    %v766 = vpack.c.bf16 %v590, %v588
    %v767 = vpack.c.bf16 %v591, %v589
    %v768 = vpack.c.bf16 %v594, %v592
    %v769 = vpack.c.bf16 %v595, %v593
    %v770 = vpack.c.bf16 %v598, %v596
    %v771 = vpack.c.bf16 %v599, %v597
    %v772 = vpack.c.bf16 %v602, %v600
    %v773 = vpack.c.bf16 %v603, %v601
    %v774 = vpack.c.bf16 %v606, %v604
    %v775 = vpack.c.bf16 %v607, %v605
    %v776 = vpack.c.bf16 %v610, %v608
    %v777 = vpack.c.bf16 %v611, %v609
    %v778 = vpack.c.bf16 %v614, %v612
    %v779 = vpack.c.bf16 %v615, %v613
    %v780 = vpack.c.bf16 %v618, %v616
    %v781 = vpack.c.bf16 %v619, %v617
    %v782 = vpack.c.bf16 %v622, %v620
    %v783 = vpack.c.bf16 %v623, %v621
    %v784 = vpack.c.bf16 %v626, %v624
    %v785 = vpack.c.bf16 %v627, %v625
    %v786 = vpack.c.bf16 %v630, %v628
    %v787 = vpack.c.bf16 %v631, %v629
    %v788 = vpack.c.bf16 %v634, %v632
    %v789 = vpack.c.bf16 %v635, %v633
    %v790 = vpack.c.bf16 %v638, %v636
    %v791 = vpack.c.bf16 %v639, %v637
    %v792 = vpack.c.bf16 %v642, %v640
    %v793 = vpack.c.bf16 %v643, %v641
    %v794 = vpack.c.bf16 %v646, %v644
    %v795 = vpack.c.bf16 %v647, %v645
    %v796 = vpack.c.bf16 %v650, %v648
    %v797 = vpack.c.bf16 %v651, %v649
    %v798 = vpack.c.bf16 %v654, %v652
    %v799 = vpack.c.bf16 %v655, %v653
    %v800 = vpack.c.bf16 %v658, %v656
    %v801 = vpack.c.bf16 %v659, %v657
    %v802 = vpack.c.bf16 %v662, %v660
    %v803 = vpack.c.bf16 %v663, %v661
    %v804 = vpack.c.bf16 %v666, %v664
    %v805 = vpack.c.bf16 %v667, %v665
    %v806 = vpack.c.bf16 %v670, %v668
    %v807 = vpack.c.bf16 %v671, %v669
    %v808 = vpack.c.bf16 %v674, %v672
    %v809 = vpack.c.bf16 %v675, %v673
    %v810 = vpack.c.bf16 %v678, %v676
    %v811 = vpack.c.bf16 %v679, %v677
    %v812 = vpack.c.bf16 %v682, %v680
    %v813 = vpack.c.bf16 %v683, %v681
    %v814 = vpack.c.bf16 %v686, %v684
    %v815 = vpack.c.bf16 %v687, %v685
    %v816 = vpack.c.bf16 %v690, %v688
    %v817 = vpack.c.bf16 %v691, %v689
    %v818 = vpack.c.bf16 %v694, %v692
    %v819 = vpack.c.bf16 %v695, %v693
    %v820 = vpack.c.bf16 %v698, %v696
    %v821 = vpack.c.bf16 %v699, %v697
    %v822 = vpack.c.bf16 %v702, %v700
    %v823 = vpack.c.bf16 %v703, %v701
    %vm824 = vcmask 523264
    %v826 = vsel %vm824, %v391, 0
    %v829 = vsel %vm824, %v399, 0
    %v832 = vsel %vm824, %v407, 0
    %v835 = vsel %vm824, %v415, 0
    %v838 = vsel %vm824, %v423, 0
    %v841 = vsel %vm824, %v431, 0
    %v844 = vsel %vm824, %v439, 0
    %v847 = vsel %vm824, %v447, 0
    %v850 = vsel %vm824, %v455, 0
    %v853 = vsel %vm824, %v463, 0
    %855 = vmatprep.subr.bf16.mxu0 %v719
    %856 = vmatpush1.bf16.msra.mxu0 %v718
    %857 = vmatprep.subr.bf16.mxu0 %v717
    %858 = vmatpush1.bf16.msra.mxu0 %v716
    %859 = vmatprep.subr.bf16.mxu0 %v715
    %860 = vmatpush1.bf16.msra.mxu0 %v714
    %861 = vmatprep.subr.bf16.mxu0 %v713
    %862 = vmatpush1.bf16.msra.mxu0 %v712
    %863 = vmatprep.subr.bf16.mxu0 %v711
    %864 = vmatpush1.bf16.msra.mxu0 %v710
    %865 = vmatprep.subr.bf16.mxu0 %v709
    %866 = vmatpush1.bf16.msra.mxu0 %v708
    %867 = vmatprep.subr.bf16.mxu0 %v707
    %868 = vmatpush1.bf16.msra.mxu0 %v706
    %869 = vmatprep.subr.bf16.mxu0 %v705
    %870 = vmatpush1.bf16.msra.mxu0 %v704
    %871 = vmatprep.subr.bf16.mxu0 %v735
    %872 = vmatpush2.bf16.msra.mxu0 %v734
    %873 = vmatprep.subr.bf16.mxu0 %v733
    %874 = vmatpush2.bf16.msra.mxu0 %v732
    %875 = vmatprep.subr.bf16.mxu0 %v731
    %876 = vmatpush2.bf16.msra.mxu0 %v730
    %877 = vmatprep.subr.bf16.mxu0 %v729
    %878 = vmatpush2.bf16.msra.mxu0 %v728
    %879 = vmatprep.subr.bf16.mxu0 %v727
    %880 = vmatpush2.bf16.msra.mxu0 %v726
    %881 = vmatprep.subr.bf16.mxu0 %v725
    %882 = vmatpush2.bf16.msra.mxu0 %v724
    %883 = vmatprep.subr.bf16.mxu0 %v723
    %884 = vmatpush2.bf16.msra.mxu0 %v722
    %885 = vmatprep.subr.bf16.mxu0 %v721
    %886 = vmatpush2.bf16.msra.mxu0 %v720
    %887 = vmatprep.mubr.bf16.mxu0 %v385
    %888 = vmatmul.mubr.bf16.gmra.mxu0 %v384
    %v889 = vpop.f32.mrf.mxu0
    %v890 = vadd.f32 0.0, %v889
    %v891 = vpop.f32.mrf.mxu0
    %v892 = vadd.f32 0.0, %v891
    %v893 = vpop.f32.mrf.mxu0
    %v894 = vadd.f32 0.0, %v893
    %v895 = vpop.f32.mrf.mxu0
    %v896 = vadd.f32 0.0, %v895
    %897 = vmatprep.mubr.bf16.mxu0 %v393
    %898 = vmatmul.mubr.bf16.gmra.mxu0 %v392
    %v899 = vpop.f32.mrf.mxu0
    %v900 = vadd.f32 0.0, %v899
    %v901 = vpop.f32.mrf.mxu0
    %v902 = vadd.f32 0.0, %v901
    %v903 = vpop.f32.mrf.mxu0
    %v904 = vadd.f32 0.0, %v903
    %v905 = vpop.f32.mrf.mxu0
    %v906 = vadd.f32 0.0, %v905
    %907 = vmatprep.mubr.bf16.mxu0 %v401
    %908 = vmatmul.mubr.bf16.gmra.mxu0 %v400
    %v909 = vpop.f32.mrf.mxu0
    %v910 = vadd.f32 0.0, %v909
    %v911 = vpop.f32.mrf.mxu0
    %v912 = vadd.f32 0.0, %v911
    %v913 = vpop.f32.mrf.mxu0
    %v914 = vadd.f32 0.0, %v913
    %v915 = vpop.f32.mrf.mxu0
    %v916 = vadd.f32 0.0, %v915
    %917 = vmatprep.mubr.bf16.mxu0 %v409
    %918 = vmatmul.mubr.bf16.gmra.mxu0 %v408
    %v919 = vpop.f32.mrf.mxu0
    %v920 = vadd.f32 0.0, %v919
    %v921 = vpop.f32.mrf.mxu0
    %v922 = vadd.f32 0.0, %v921
    %v923 = vpop.f32.mrf.mxu0
    %v924 = vadd.f32 0.0, %v923
    %v925 = vpop.f32.mrf.mxu0
    %v926 = vadd.f32 0.0, %v925
    %927 = vmatprep.mubr.bf16.mxu0 %v417
    %928 = vmatmul.mubr.bf16.gmra.mxu0 %v416
    %v929 = vpop.f32.mrf.mxu0
    %v930 = vadd.f32 0.0, %v929
    %v931 = vpop.f32.mrf.mxu0
    %v932 = vadd.f32 0.0, %v931
    %v933 = vpop.f32.mrf.mxu0
    %v934 = vadd.f32 0.0, %v933
    %v935 = vpop.f32.mrf.mxu0
    %v936 = vadd.f32 0.0, %v935
    %937 = vmatprep.mubr.bf16.mxu0 %v425
    %938 = vmatmul.mubr.bf16.gmra.mxu0 %v424
    %v939 = vpop.f32.mrf.mxu0
    %v940 = vadd.f32 0.0, %v939
    %v941 = vpop.f32.mrf.mxu0
    %v942 = vadd.f32 0.0, %v941
    %v943 = vpop.f32.mrf.mxu0
    %v944 = vadd.f32 0.0, %v943
    %v945 = vpop.f32.mrf.mxu0
    %v946 = vadd.f32 0.0, %v945
    %947 = vmatprep.mubr.bf16.mxu0 %v433
    %948 = vmatmul.mubr.bf16.gmra.mxu0 %v432
    %v949 = vpop.f32.mrf.mxu0
    %v950 = vadd.f32 0.0, %v949
    %v951 = vpop.f32.mrf.mxu0
    %v952 = vadd.f32 0.0, %v951
    %v953 = vpop.f32.mrf.mxu0
    %v954 = vadd.f32 0.0, %v953
    %v955 = vpop.f32.mrf.mxu0
    %v956 = vadd.f32 0.0, %v955
    %957 = vmatprep.mubr.bf16.mxu0 %v441
    %958 = vmatmul.mubr.bf16.gmra.mxu0 %v440
    %v959 = vpop.f32.mrf.mxu0
    %v960 = vadd.f32 0.0, %v959
    %v961 = vpop.f32.mrf.mxu0
    %v962 = vadd.f32 0.0, %v961
    %v963 = vpop.f32.mrf.mxu0
    %v964 = vadd.f32 0.0, %v963
    %v965 = vpop.f32.mrf.mxu0
    %v966 = vadd.f32 0.0, %v965
    %967 = vmatprep.mubr.bf16.mxu0 %v449
    %968 = vmatmul.mubr.bf16.gmra.mxu0 %v448
    %v969 = vpop.f32.mrf.mxu0
    %v970 = vadd.f32 0.0, %v969
    %v971 = vpop.f32.mrf.mxu0
    %v972 = vadd.f32 0.0, %v971
    %v973 = vpop.f32.mrf.mxu0
    %v974 = vadd.f32 0.0, %v973
    %v975 = vpop.f32.mrf.mxu0
    %v976 = vadd.f32 0.0, %v975
    %977 = vmatprep.mubr.bf16.mxu0 %v457
    %978 = vmatmul.mubr.bf16.gmra.mxu0 %v456
    %v979 = vpop.f32.mrf.mxu0
    %v980 = vadd.f32 0.0, %v979
    %v981 = vpop.f32.mrf.mxu0
    %v982 = vadd.f32 0.0, %v981
    %v983 = vpop.f32.mrf.mxu0
    %v984 = vadd.f32 0.0, %v983
    %v985 = vpop.f32.mrf.mxu0
    %v986 = vadd.f32 0.0, %v985
    %987 = vdwg.mxu0
    %988 = vmatprep.subr.bf16.mxu0 %v751
    %989 = vmatpush1.bf16.msra.mxu0 %v750
    %990 = vmatprep.subr.bf16.mxu0 %v749
    %991 = vmatpush1.bf16.msra.mxu0 %v748
    %992 = vmatprep.subr.bf16.mxu0 %v747
    %993 = vmatpush1.bf16.msra.mxu0 %v746
    %994 = vmatprep.subr.bf16.mxu0 %v745
    %995 = vmatpush1.bf16.msra.mxu0 %v744
    %996 = vmatprep.subr.bf16.mxu0 %v743
    %997 = vmatpush1.bf16.msra.mxu0 %v742
    %998 = vmatprep.subr.bf16.mxu0 %v741
    %999 = vmatpush1.bf16.msra.mxu0 %v740
    %1000 = vmatprep.subr.bf16.mxu0 %v739
    %1001 = vmatpush1.bf16.msra.mxu0 %v738
    %1002 = vmatprep.subr.bf16.mxu0 %v737
    %1003 = vmatpush1.bf16.msra.mxu0 %v736
    %1004 = vmatprep.subr.bf16.mxu0 %v767
    %1005 = vmatpush2.bf16.msra.mxu0 %v766
    %1006 = vmatprep.subr.bf16.mxu0 %v765
    %1007 = vmatpush2.bf16.msra.mxu0 %v764
    %1008 = vmatprep.subr.bf16.mxu0 %v763
    %1009 = vmatpush2.bf16.msra.mxu0 %v762
    %1010 = vmatprep.subr.bf16.mxu0 %v761
    %1011 = vmatpush2.bf16.msra.mxu0 %v760
    %1012 = vmatprep.subr.bf16.mxu0 %v759
    %1013 = vmatpush2.bf16.msra.mxu0 %v758
    %1014 = vmatprep.subr.bf16.mxu0 %v757
    %1015 = vmatpush2.bf16.msra.mxu0 %v756
    %1016 = vmatprep.subr.bf16.mxu0 %v755
    %1017 = vmatpush2.bf16.msra.mxu0 %v754
    %1018 = vmatprep.subr.bf16.mxu0 %v753
    %1019 = vmatpush2.bf16.msra.mxu0 %v752
    %1020 = vmatprep.mubr.bf16.mxu0 %v387
    %1021 = vmatmul.mubr.bf16.gmra.mxu0 %v386
    %v1022 = vpop.f32.mrf.mxu0
    %v1023 = vadd.f32 %v890, %v1022
    %v1024 = vpop.f32.mrf.mxu0
    %v1025 = vadd.f32 %v892, %v1024
    %v1026 = vpop.f32.mrf.mxu0
    %v1027 = vadd.f32 %v894, %v1026
    %v1028 = vpop.f32.mrf.mxu0
    %v1029 = vadd.f32 %v896, %v1028
    %1030 = vmatprep.mubr.bf16.mxu0 %v395
    %1031 = vmatmul.mubr.bf16.gmra.mxu0 %v394
    %v1032 = vpop.f32.mrf.mxu0
    %v1033 = vadd.f32 %v900, %v1032
    %v1034 = vpop.f32.mrf.mxu0
    %v1035 = vadd.f32 %v902, %v1034
    %v1036 = vpop.f32.mrf.mxu0
    %v1037 = vadd.f32 %v904, %v1036
    %v1038 = vpop.f32.mrf.mxu0
    %v1039 = vadd.f32 %v906, %v1038
    %1040 = vmatprep.mubr.bf16.mxu0 %v403
    %1041 = vmatmul.mubr.bf16.gmra.mxu0 %v402
    %v1042 = vpop.f32.mrf.mxu0
    %v1043 = vadd.f32 %v910, %v1042
    %v1044 = vpop.f32.mrf.mxu0
    %v1045 = vadd.f32 %v912, %v1044
    %v1046 = vpop.f32.mrf.mxu0
    %v1047 = vadd.f32 %v914, %v1046
    %v1048 = vpop.f32.mrf.mxu0
    %v1049 = vadd.f32 %v916, %v1048
    %1050 = vmatprep.mubr.bf16.mxu0 %v411
    %1051 = vmatmul.mubr.bf16.gmra.mxu0 %v410
    %v1052 = vpop.f32.mrf.mxu0
    %v1053 = vadd.f32 %v920, %v1052
    %v1054 = vpop.f32.mrf.mxu0
    %v1055 = vadd.f32 %v922, %v1054
    %v1056 = vpop.f32.mrf.mxu0
    %v1057 = vadd.f32 %v924, %v1056
    %v1058 = vpop.f32.mrf.mxu0
    %v1059 = vadd.f32 %v926, %v1058
    %1060 = vmatprep.mubr.bf16.mxu0 %v419
    %1061 = vmatmul.mubr.bf16.gmra.mxu0 %v418
    %v1062 = vpop.f32.mrf.mxu0
    %v1063 = vadd.f32 %v930, %v1062
    %v1064 = vpop.f32.mrf.mxu0
    %v1065 = vadd.f32 %v932, %v1064
    %v1066 = vpop.f32.mrf.mxu0
    %v1067 = vadd.f32 %v934, %v1066
    %v1068 = vpop.f32.mrf.mxu0
    %v1069 = vadd.f32 %v936, %v1068
    %1070 = vmatprep.mubr.bf16.mxu0 %v427
    %1071 = vmatmul.mubr.bf16.gmra.mxu0 %v426
    %v1072 = vpop.f32.mrf.mxu0
    %v1073 = vadd.f32 %v940, %v1072
    %v1074 = vpop.f32.mrf.mxu0
    %v1075 = vadd.f32 %v942, %v1074
    %v1076 = vpop.f32.mrf.mxu0
    %v1077 = vadd.f32 %v944, %v1076
    %v1078 = vpop.f32.mrf.mxu0
    %v1079 = vadd.f32 %v946, %v1078
    %1080 = vmatprep.mubr.bf16.mxu0 %v435
    %1081 = vmatmul.mubr.bf16.gmra.mxu0 %v434
    %v1082 = vpop.f32.mrf.mxu0
    %v1083 = vadd.f32 %v950, %v1082
    %v1084 = vpop.f32.mrf.mxu0
    %v1085 = vadd.f32 %v952, %v1084
    %v1086 = vpop.f32.mrf.mxu0
    %v1087 = vadd.f32 %v954, %v1086
    %v1088 = vpop.f32.mrf.mxu0
    %v1089 = vadd.f32 %v956, %v1088
    %1090 = vmatprep.mubr.bf16.mxu0 %v443
    %1091 = vmatmul.mubr.bf16.gmra.mxu0 %v442
    %v1092 = vpop.f32.mrf.mxu0
    %v1093 = vadd.f32 %v960, %v1092
    %v1094 = vpop.f32.mrf.mxu0
    %v1095 = vadd.f32 %v962, %v1094
    %v1096 = vpop.f32.mrf.mxu0
    %v1097 = vadd.f32 %v964, %v1096
    %v1098 = vpop.f32.mrf.mxu0
    %v1099 = vadd.f32 %v966, %v1098
    %1100 = vmatprep.mubr.bf16.mxu0 %v451
    %1101 = vmatmul.mubr.bf16.gmra.mxu0 %v450
    %v1102 = vpop.f32.mrf.mxu0
    %v1103 = vadd.f32 %v970, %v1102
    %v1104 = vpop.f32.mrf.mxu0
    %v1105 = vadd.f32 %v972, %v1104
    %v1106 = vpop.f32.mrf.mxu0
    %v1107 = vadd.f32 %v974, %v1106
    %v1108 = vpop.f32.mrf.mxu0
    %v1109 = vadd.f32 %v976, %v1108
    %1110 = vmatprep.mubr.bf16.mxu0 %v459
    %1111 = vmatmul.mubr.bf16.gmra.mxu0 %v458
    %v1112 = vpop.f32.mrf.mxu0
    %v1113 = vadd.f32 %v980, %v1112
    %v1114 = vpop.f32.mrf.mxu0
    %v1115 = vadd.f32 %v982, %v1114
    %v1116 = vpop.f32.mrf.mxu0
    %v1117 = vadd.f32 %v984, %v1116
    %v1118 = vpop.f32.mrf.mxu0
    %v1119 = vadd.f32 %v986, %v1118
    %1120 = vdwg.mxu0
    %1121 = vmatprep.subr.bf16.mxu0 %v783
    %1122 = vmatpush1.bf16.msra.mxu0 %v782
    %1123 = vmatprep.subr.bf16.mxu0 %v781
    %1124 = vmatpush1.bf16.msra.mxu0 %v780
    %1125 = vmatprep.subr.bf16.mxu0 %v779
    %1126 = vmatpush1.bf16.msra.mxu0 %v778
    %1127 = vmatprep.subr.bf16.mxu0 %v777
    %1128 = vmatpush1.bf16.msra.mxu0 %v776
    %1129 = vmatprep.subr.bf16.mxu0 %v775
    %1130 = vmatpush1.bf16.msra.mxu0 %v774
    %1131 = vmatprep.subr.bf16.mxu0 %v773
    %1132 = vmatpush1.bf16.msra.mxu0 %v772
    %1133 = vmatprep.subr.bf16.mxu0 %v771
    %1134 = vmatpush1.bf16.msra.mxu0 %v770
    %1135 = vmatprep.subr.bf16.mxu0 %v769
    %1136 = vmatpush1.bf16.msra.mxu0 %v768
    %1137 = vmatprep.subr.bf16.mxu0 %v799
    %1138 = vmatpush2.bf16.msra.mxu0 %v798
    %1139 = vmatprep.subr.bf16.mxu0 %v797
    %1140 = vmatpush2.bf16.msra.mxu0 %v796
    %1141 = vmatprep.subr.bf16.mxu0 %v795
    %1142 = vmatpush2.bf16.msra.mxu0 %v794
    %1143 = vmatprep.subr.bf16.mxu0 %v793
    %1144 = vmatpush2.bf16.msra.mxu0 %v792
    %1145 = vmatprep.subr.bf16.mxu0 %v791
    %1146 = vmatpush2.bf16.msra.mxu0 %v790
    %1147 = vmatprep.subr.bf16.mxu0 %v789
    %1148 = vmatpush2.bf16.msra.mxu0 %v788
    %1149 = vmatprep.subr.bf16.mxu0 %v787
    %1150 = vmatpush2.bf16.msra.mxu0 %v786
    %1151 = vmatprep.subr.bf16.mxu0 %v785
    %1152 = vmatpush2.bf16.msra.mxu0 %v784
    %1153 = vmatprep.mubr.bf16.mxu0 %v389
    %1154 = vmatmul.mubr.bf16.gmra.mxu0 %v388
    %v1155 = vpop.f32.mrf.mxu0
    %v1156 = vadd.f32 %v1023, %v1155
    %v1157 = vpop.f32.mrf.mxu0
    %v1158 = vadd.f32 %v1025, %v1157
    %v1159 = vpop.f32.mrf.mxu0
    %v1160 = vadd.f32 %v1027, %v1159
    %v1161 = vpop.f32.mrf.mxu0
    %v1162 = vadd.f32 %v1029, %v1161
    %1163 = vmatprep.mubr.bf16.mxu0 %v397
    %1164 = vmatmul.mubr.bf16.gmra.mxu0 %v396
    %v1165 = vpop.f32.mrf.mxu0
    %v1166 = vadd.f32 %v1033, %v1165
    %v1167 = vpop.f32.mrf.mxu0
    %v1168 = vadd.f32 %v1035, %v1167
    %v1169 = vpop.f32.mrf.mxu0
    %v1170 = vadd.f32 %v1037, %v1169
    %v1171 = vpop.f32.mrf.mxu0
    %v1172 = vadd.f32 %v1039, %v1171
    %1173 = vmatprep.mubr.bf16.mxu0 %v405
    %1174 = vmatmul.mubr.bf16.gmra.mxu0 %v404
    %v1175 = vpop.f32.mrf.mxu0
    %v1176 = vadd.f32 %v1043, %v1175
    %v1177 = vpop.f32.mrf.mxu0
    %v1178 = vadd.f32 %v1045, %v1177
    %v1179 = vpop.f32.mrf.mxu0
    %v1180 = vadd.f32 %v1047, %v1179
    %v1181 = vpop.f32.mrf.mxu0
    %v1182 = vadd.f32 %v1049, %v1181
    %1183 = vmatprep.mubr.bf16.mxu0 %v413
    %1184 = vmatmul.mubr.bf16.gmra.mxu0 %v412
    %v1185 = vpop.f32.mrf.mxu0
    %v1186 = vadd.f32 %v1053, %v1185
    %v1187 = vpop.f32.mrf.mxu0
    %v1188 = vadd.f32 %v1055, %v1187
    %v1189 = vpop.f32.mrf.mxu0
    %v1190 = vadd.f32 %v1057, %v1189
    %v1191 = vpop.f32.mrf.mxu0
    %v1192 = vadd.f32 %v1059, %v1191
    %1193 = vmatprep.mubr.bf16.mxu0 %v421
    %1194 = vmatmul.mubr.bf16.gmra.mxu0 %v420
    %v1195 = vpop.f32.mrf.mxu0
    %v1196 = vadd.f32 %v1063, %v1195
    %v1197 = vpop.f32.mrf.mxu0
    %v1198 = vadd.f32 %v1065, %v1197
    %v1199 = vpop.f32.mrf.mxu0
    %v1200 = vadd.f32 %v1067, %v1199
    %v1201 = vpop.f32.mrf.mxu0
    %v1202 = vadd.f32 %v1069, %v1201
    %1203 = vmatprep.mubr.bf16.mxu0 %v429
    %1204 = vmatmul.mubr.bf16.gmra.mxu0 %v428
    %v1205 = vpop.f32.mrf.mxu0
    %v1206 = vadd.f32 %v1073, %v1205
    %v1207 = vpop.f32.mrf.mxu0
    %v1208 = vadd.f32 %v1075, %v1207
    %v1209 = vpop.f32.mrf.mxu0
    %v1210 = vadd.f32 %v1077, %v1209
    %v1211 = vpop.f32.mrf.mxu0
    %v1212 = vadd.f32 %v1079, %v1211
    %1213 = vmatprep.mubr.bf16.mxu0 %v437
    %1214 = vmatmul.mubr.bf16.gmra.mxu0 %v436
    %v1215 = vpop.f32.mrf.mxu0
    %v1216 = vadd.f32 %v1083, %v1215
    %v1217 = vpop.f32.mrf.mxu0
    %v1218 = vadd.f32 %v1085, %v1217
    %v1219 = vpop.f32.mrf.mxu0
    %v1220 = vadd.f32 %v1087, %v1219
    %v1221 = vpop.f32.mrf.mxu0
    %v1222 = vadd.f32 %v1089, %v1221
    %1223 = vmatprep.mubr.bf16.mxu0 %v445
    %1224 = vmatmul.mubr.bf16.gmra.mxu0 %v444
    %v1225 = vpop.f32.mrf.mxu0
    %v1226 = vadd.f32 %v1093, %v1225
    %v1227 = vpop.f32.mrf.mxu0
    %v1228 = vadd.f32 %v1095, %v1227
    %v1229 = vpop.f32.mrf.mxu0
    %v1230 = vadd.f32 %v1097, %v1229
    %v1231 = vpop.f32.mrf.mxu0
    %v1232 = vadd.f32 %v1099, %v1231
    %1233 = vmatprep.mubr.bf16.mxu0 %v453
    %1234 = vmatmul.mubr.bf16.gmra.mxu0 %v452
    %v1235 = vpop.f32.mrf.mxu0
    %v1236 = vadd.f32 %v1103, %v1235
    %v1237 = vpop.f32.mrf.mxu0
    %v1238 = vadd.f32 %v1105, %v1237
    %v1239 = vpop.f32.mrf.mxu0
    %v1240 = vadd.f32 %v1107, %v1239
    %v1241 = vpop.f32.mrf.mxu0
    %v1242 = vadd.f32 %v1109, %v1241
    %1243 = vmatprep.mubr.bf16.mxu0 %v461
    %1244 = vmatmul.mubr.bf16.gmra.mxu0 %v460
    %v1245 = vpop.f32.mrf.mxu0
    %v1246 = vadd.f32 %v1113, %v1245
    %v1247 = vpop.f32.mrf.mxu0
    %v1248 = vadd.f32 %v1115, %v1247
    %v1249 = vpop.f32.mrf.mxu0
    %v1250 = vadd.f32 %v1117, %v1249
    %v1251 = vpop.f32.mrf.mxu0
    %v1252 = vadd.f32 %v1119, %v1251
    %1253 = vdwg.mxu0
    %1254 = vmatprep.subr.bf16.mxu0 %v815
    %1255 = vmatpush1.bf16.msra.mxu0 %v814
    %1256 = vmatprep.subr.bf16.mxu0 %v813
    %1257 = vmatpush1.bf16.msra.mxu0 %v812
    %1258 = vmatprep.subr.bf16.mxu0 %v811
    %1259 = vmatpush1.bf16.msra.mxu0 %v810
    %1260 = vmatprep.subr.bf16.mxu0 %v809
    %1261 = vmatpush1.bf16.msra.mxu0 %v808
    %1262 = vmatprep.subr.bf16.mxu0 %v807
    %1263 = vmatpush1.bf16.msra.mxu0 %v806
    %1264 = vmatprep.subr.bf16.mxu0 %v805
    %1265 = vmatpush1.bf16.msra.mxu0 %v804
    %1266 = vmatprep.subr.bf16.mxu0 %v803
    %1267 = vmatpush1.bf16.msra.mxu0 %v802
    %1268 = vmatprep.subr.bf16.mxu0 %v801
    %1269 = vmatpush1.bf16.msra.mxu0 %v800
    %1270 = vmatprep.subr.bf16.mxu0 0
    %1271 = vmatpush2.bf16.msra.mxu0 0
    %1272 = vmatprep.subr.bf16.mxu0 0
    %1273 = vmatpush2.bf16.msra.mxu0 0
    %1274 = vmatprep.subr.bf16.mxu0 0
    %1275 = vmatpush2.bf16.msra.mxu0 0
    %1276 = vmatprep.subr.bf16.mxu0 0
    %1277 = vmatpush2.bf16.msra.mxu0 0
    %1278 = vmatprep.subr.bf16.mxu0 %v823
    %1279 = vmatpush2.bf16.msra.mxu0 %v822
    %1280 = vmatprep.subr.bf16.mxu0 %v821
    %1281 = vmatpush2.bf16.msra.mxu0 %v820
    %1282 = vmatprep.subr.bf16.mxu0 %v819
    %1283 = vmatpush2.bf16.msra.mxu0 %v818
    %1284 = vmatprep.subr.bf16.mxu0 %v817
    %1285 = vmatpush2.bf16.msra.mxu0 %v816
    %1286 = vmatprep.mubr.bf16.mxu0 %v826
    %1287 = vmatmul.mubr.bf16.gmra.mxu0 %v390
    %v1288 = vpop.f32.mrf.mxu0
    %v1289 = vadd.f32 %v1156, %v1288
    %v1290 = vpop.f32.mrf.mxu0
    %v1291 = vadd.f32 %v1158, %v1290
    %v1292 = vpop.f32.mrf.mxu0
    %v1293 = vadd.f32 %v1160, %v1292
    %v1294 = vpop.f32.mrf.mxu0
    %v1295 = vadd.f32 %v1162, %v1294
    %1296 = vmatprep.mubr.bf16.mxu0 %v829
    %1297 = vmatmul.mubr.bf16.gmra.mxu0 %v398
    %v1298 = vpop.f32.mrf.mxu0
    %v1299 = vadd.f32 %v1166, %v1298
    %v1300 = vpop.f32.mrf.mxu0
    %v1301 = vadd.f32 %v1168, %v1300
    %v1302 = vpop.f32.mrf.mxu0
    %v1303 = vadd.f32 %v1170, %v1302
    %v1304 = vpop.f32.mrf.mxu0
    %v1305 = vadd.f32 %v1172, %v1304
    %1306 = vmatprep.mubr.bf16.mxu0 %v832
    %1307 = vmatmul.mubr.bf16.gmra.mxu0 %v406
    %v1308 = vpop.f32.mrf.mxu0
    %v1309 = vadd.f32 %v1176, %v1308
    %v1310 = vpop.f32.mrf.mxu0
    %v1311 = vadd.f32 %v1178, %v1310
    %v1312 = vpop.f32.mrf.mxu0
    %v1313 = vadd.f32 %v1180, %v1312
    %v1314 = vpop.f32.mrf.mxu0
    %v1315 = vadd.f32 %v1182, %v1314
    %1316 = vmatprep.mubr.bf16.mxu0 %v835
    %1317 = vmatmul.mubr.bf16.gmra.mxu0 %v414
    %v1318 = vpop.f32.mrf.mxu0
    %v1319 = vadd.f32 %v1186, %v1318
    %v1320 = vpop.f32.mrf.mxu0
    %v1321 = vadd.f32 %v1188, %v1320
    %v1322 = vpop.f32.mrf.mxu0
    %v1323 = vadd.f32 %v1190, %v1322
    %v1324 = vpop.f32.mrf.mxu0
    %v1325 = vadd.f32 %v1192, %v1324
    %1326 = vmatprep.mubr.bf16.mxu0 %v838
    %1327 = vmatmul.mubr.bf16.gmra.mxu0 %v422
    %v1328 = vpop.f32.mrf.mxu0
    %v1329 = vadd.f32 %v1196, %v1328
    %v1330 = vpop.f32.mrf.mxu0
    %v1331 = vadd.f32 %v1198, %v1330
    %v1332 = vpop.f32.mrf.mxu0
    %v1333 = vadd.f32 %v1200, %v1332
    %v1334 = vpop.f32.mrf.mxu0
    %v1335 = vadd.f32 %v1202, %v1334
    %1336 = vmatprep.mubr.bf16.mxu0 %v841
    %1337 = vmatmul.mubr.bf16.gmra.mxu0 %v430
    %v1338 = vpop.f32.mrf.mxu0
    %v1339 = vadd.f32 %v1206, %v1338
    %v1340 = vpop.f32.mrf.mxu0
    %v1341 = vadd.f32 %v1208, %v1340
    %v1342 = vpop.f32.mrf.mxu0
    %v1343 = vadd.f32 %v1210, %v1342
    %v1344 = vpop.f32.mrf.mxu0
    %v1345 = vadd.f32 %v1212, %v1344
    %1346 = vmatprep.mubr.bf16.mxu0 %v844
    %1347 = vmatmul.mubr.bf16.gmra.mxu0 %v438
    %v1348 = vpop.f32.mrf.mxu0
    %v1349 = vadd.f32 %v1216, %v1348
    %v1350 = vpop.f32.mrf.mxu0
    %v1351 = vadd.f32 %v1218, %v1350
    %v1352 = vpop.f32.mrf.mxu0
    %v1353 = vadd.f32 %v1220, %v1352
    %v1354 = vpop.f32.mrf.mxu0
    %v1355 = vadd.f32 %v1222, %v1354
    %1356 = vmatprep.mubr.bf16.mxu0 %v847
    %1357 = vmatmul.mubr.bf16.gmra.mxu0 %v446
    %v1358 = vpop.f32.mrf.mxu0
    %v1359 = vadd.f32 %v1226, %v1358
    %v1360 = vpop.f32.mrf.mxu0
    %v1361 = vadd.f32 %v1228, %v1360
    %v1362 = vpop.f32.mrf.mxu0
    %v1363 = vadd.f32 %v1230, %v1362
    %v1364 = vpop.f32.mrf.mxu0
    %v1365 = vadd.f32 %v1232, %v1364
    %1366 = vmatprep.mubr.bf16.mxu0 %v850
    %1367 = vmatmul.mubr.bf16.gmra.mxu0 %v454
    %v1368 = vpop.f32.mrf.mxu0
    %v1369 = vadd.f32 %v1236, %v1368
    %v1370 = vpop.f32.mrf.mxu0
    %v1371 = vadd.f32 %v1238, %v1370
    %v1372 = vpop.f32.mrf.mxu0
    %v1373 = vadd.f32 %v1240, %v1372
    %v1374 = vpop.f32.mrf.mxu0
    %v1375 = vadd.f32 %v1242, %v1374
    %1376 = vmatprep.mubr.bf16.mxu0 %v853
    %1377 = vmatmul.mubr.bf16.gmra.mxu0 %v462
    %v1378 = vpop.f32.mrf.mxu0
    %v1379 = vadd.f32 %v1246, %v1378
    %v1380 = vpop.f32.mrf.mxu0
    %v1381 = vadd.f32 %v1248, %v1380
    %v1382 = vpop.f32.mrf.mxu0
    %v1383 = vadd.f32 %v1250, %v1382
    %v1384 = vpop.f32.mrf.mxu0
    %v1385 = vadd.f32 %v1252, %v1384
    %1386 = vdwg.mxu0
    %1387 = vst [vmem:[#allocation2] sm:$0xff] %v1289
    %vm1388 = vcmask 556032
    %1389 = vst.msk [vmem:[#allocation2 + $0x8] sm:$0xff] %vm1388, %v1291
    %1390 = vst [vmem:[#allocation2 + $0x10] sm:$0xff] %v1293
    %1391 = vst.msk [vmem:[#allocation2 + $0x18] sm:$0xff] %vm1388, %v1295
    %1392 = vst [vmem:[#allocation2 + $0x20] sm:$0xff] %v1299
    %1393 = vst.msk [vmem:[#allocation2 + $0x28] sm:$0xff] %vm1388, %v1301
    %1394 = vst [vmem:[#allocation2 + $0x30] sm:$0xff] %v1303
    %1395 = vst.msk [vmem:[#allocation2 + $0x38] sm:$0xff] %vm1388, %v1305
    %1396 = vst [vmem:[#allocation2 + $0x40] sm:$0xff] %v1309
    %1397 = vst.msk [vmem:[#allocation2 + $0x48] sm:$0xff] %vm1388, %v1311
    %1398 = vst [vmem:[#allocation2 + $0x50] sm:$0xff] %v1313
    %1399 = vst.msk [vmem:[#allocation2 + $0x58] sm:$0xff] %vm1388, %v1315
    %1400 = vst [vmem:[#allocation2 + $0x60] sm:$0xff] %v1319
    %1401 = vst.msk [vmem:[#allocation2 + $0x68] sm:$0xff] %vm1388, %v1321
    %1402 = vst [vmem:[#allocation2 + $0x70] sm:$0xff] %v1323
    %1403 = vst.msk [vmem:[#allocation2 + $0x78] sm:$0xff] %vm1388, %v1325
    %1404 = vst [vmem:[#allocation2 + $0x80] sm:$0xff] %v1329
    %1405 = vst.msk [vmem:[#allocation2 + $0x88] sm:$0xff] %vm1388, %v1331
    %1406 = vst [vmem:[#allocation2 + $0x90] sm:$0xff] %v1333
    %1407 = vst.msk [vmem:[#allocation2 + $0x98] sm:$0xff] %vm1388, %v1335
    %1408 = vst [vmem:[#allocation2 + $0xa0] sm:$0xff] %v1339
    %1409 = vst.msk [vmem:[#allocation2 + $0xa8] sm:$0xff] %vm1388, %v1341
    %1410 = vst [vmem:[#allocation2 + $0xb0] sm:$0xff] %v1343
    %1411 = vst.msk [vmem:[#allocation2 + $0xb8] sm:$0xff] %vm1388, %v1345
    %1412 = vst [vmem:[#allocation2 + $0xc0] sm:$0xff] %v1349
    %1413 = vst.msk [vmem:[#allocation2 + $0xc8] sm:$0xff] %vm1388, %v1351
    %1414 = vst [vmem:[#allocation2 + $0xd0] sm:$0xff] %v1353
    %1415 = vst.msk [vmem:[#allocation2 + $0xd8] sm:$0xff] %vm1388, %v1355
    %1416 = vst [vmem:[#allocation2 + $0xe0] sm:$0xff] %v1359
    %1417 = vst.msk [vmem:[#allocation2 + $0xe8] sm:$0xff] %vm1388, %v1361
    %1418 = vst [vmem:[#allocation2 + $0xf0] sm:$0xff] %v1363
    %1419 = vst.msk [vmem:[#allocation2 + $0xf8] sm:$0xff] %vm1388, %v1365
    %1420 = vst [vmem:[#allocation2 + $0x100] sm:$0xff] %v1369
    %1421 = vst.msk [vmem:[#allocation2 + $0x108] sm:$0xff] %vm1388, %v1371
    %1422 = vst [vmem:[#allocation2 + $0x110] sm:$0xff] %v1373
    %1423 = vst.msk [vmem:[#allocation2 + $0x118] sm:$0xff] %vm1388, %v1375
    %1424 = vst [vmem:[#allocation2 + $0x120] sm:$0xff] %v1379
    %1425 = vst.msk [vmem:[#allocation2 + $0x128] sm:$0xff] %vm1388, %v1381
    %1426 = vst [vmem:[#allocation2 + $0x130] sm:$0xff] %v1383
    %1427 = vst.msk [vmem:[#allocation2 + $0x138] sm:$0xff] %vm1388, %v1385
    // Predicated region
    $region14: #{tpu_custom_call.1} parent=1 // pred_check
      _
    $region15: #{tpu_custom_call.1} parent=1 // pred_check_branch
      %1429 = sbr.rel (0) target = $region17
    $region16: #{tpu_custom_call.1} parent=1 // pred_region
      %s1431 = ssub.s32 5120, 5120
      %1432 = vsyncadd [#allocation3], %s1431
      %s1433 = sshll.u32 [#allocation2], 4
      %s1434 = int_to_ptr.vmem [resolvable:$true] %s1433
      %1439 = dma.vmem_to_hbm [thread:$0]  %s1434, 5120, %s3, [#allocation3], 256, 256, 16
    $region17: #{tpu_custom_call.1} parent=1 // pred_fallthru
      _
    // Predicated region
    $region18: #{tpu_custom_call.1} parent=1 // pred_check
      _
    $region19: #{tpu_custom_call.1} parent=1 // pred_check_branch
      %1441 = sbr.rel (0) target = $region21
    $region20: #{tpu_custom_call.1} parent=1 // pred_region
      %1442 = dma.done [#allocation3], 5120
    $region21: #{tpu_custom_call.1} parent=1 // pred_fallthru
      _
    %1443 = vsyncpa [#allocation3], 1

</llo_original>
